<compile_context>
chip_gen: v5e
topology: v5e:2x2
jax: 0.10.0
libtpu: 0.0.40
codegen_flags: <defaults>
</compile_context>

<pallas_src>
import functools

import jax
import jax.numpy as jnp
from jax import lax
from jax.experimental import pallas as pl
from jax.experimental.pallas import tpu as pltpu


_NEG_BIG = -1e30  # acts as -inf for the masked softmax without inf arithmetic


def _round_up(n, m):
    return ((n + m - 1) // m) * m


def predictor_kernel(x_ref, w1_ref, b1_ref, w2_ref, b2_ref, out_ref, acc_ref,
                     *, num_preds, num_modes):
    """Grid = (batch tiles, K tiles over D); K (reduction) is the last axis."""
    k = pl.program_id(1)

    @pl.when(k == 0)
    def _init():
        acc_ref[...] = jnp.zeros_like(acc_ref)

    # trunk matmul K-chunk; x cast to bf16 in-kernel (no wrapper HBM pass)
    acc_ref[...] += jnp.dot(x_ref[...].astype(jnp.bfloat16), w1_ref[...],
                            preferred_element_type=jnp.float32)

    @pl.when(k == pl.num_programs(1) - 1)
    def _epilogue():
        h1 = jnp.maximum(acc_ref[...] + b1_ref[...], 0.0)
        # fused pred+conf head matmul; target_scale already folded into W2/b2
        h = jnp.dot(h1.astype(w2_ref.dtype), w2_ref[...],
                    preferred_element_type=jnp.float32) + b2_ref[...]

        # masked softmax over the confidence columns (axis=1)
        col = lax.broadcasted_iota(jnp.int32, h.shape, dimension=1)
        is_conf = jnp.logical_and(col >= num_preds, col < num_preds + num_modes)
        logits = jnp.where(is_conf, h, _NEG_BIG)
        m = jnp.max(logits, axis=1, keepdims=True)
        e = jnp.exp(logits - m)                        # 0 outside conf columns
        denom = jnp.sum(e, axis=1, keepdims=True)
        conf = e * pl.reciprocal(denom, approx=False)  # exact: sum(conf) == 1

        # lane-dense slab: pred cols -> h (pre-scaled), conf cols -> softmax,
        # padding cols -> 0 (zero weights / zero bias)
        out_ref[...] = jnp.where(is_conf, conf, h).astype(out_ref.dtype)


def prepare_predictor_params(params, target_scale, num_modes, future_len):
    """One-time parameter prep (bf16 cast, padding, target_scale folding).

    Call this at parameter-load time, NOT per forward call.
    """
    W1 = jnp.asarray(params["W1"], jnp.float32)
    b1 = jnp.asarray(params["b1"], jnp.float32).reshape(1, -1)
    W2 = jnp.asarray(params["W2"], jnp.float32)
    b2 = jnp.asarray(params["b2"], jnp.float32).reshape(1, -1)

    D, Hd = W1.shape
    num_preds = 2 * future_len * num_modes
    n_out = num_preds + num_modes
    assert W2.shape == (Hd, n_out) and b2.shape == (1, n_out)

    n_pad = _round_up(n_out, 128)      # lane-dense output slab
    Hd_pad = _round_up(Hd, 256)        # MXU-width trunk-N / head-K (v6e/v7x)
    D_pad = _round_up(D, 128)          # K-tiling alignment

    # Fold target_scale into the pred columns of the head:
    #   (h1 @ W2 + b2) * s == h1 @ (W2 * s) + b2 * s   (per column)
    if target_scale is None:
        scale_cols = jnp.ones((n_pad,), jnp.float32)
    else:
        ts = jnp.asarray(target_scale, jnp.float32).reshape(-1)  # (2*future_len,)
        scale_cols = jnp.concatenate(
            [jnp.tile(ts, num_modes),                             # pred columns
             jnp.ones((n_pad - num_preds,), jnp.float32)])        # conf + pad

    W2p = jnp.pad(W2, ((0, Hd_pad - Hd), (0, n_pad - n_out))) * scale_cols[None, :]
    b2p = jnp.pad(b2, ((0, 0), (0, n_pad - n_out))) * scale_cols[None, :]
    W1p = jnp.pad(W1, ((0, D_pad - D), (0, Hd_pad - Hd)))
    b1p = jnp.pad(b1, ((0, 0), (0, Hd_pad - Hd)))

    return {
        "W1": W1p.astype(jnp.bfloat16),   # bf16 MXU operands
        "b1": b1p,                        # biases stay f32
        "W2": W2p.astype(jnp.bfloat16),
        "b2": b2p,
        "D": D, "D_pad": D_pad, "Hd_pad": Hd_pad,
        "n_pad": n_pad, "n_out": n_out,
        "num_preds": num_preds, "num_modes": num_modes,
        "future_len": future_len,
    }


def _pick_tiles(B, D_pad):
    # batch tile: sublane-aligned; >=2 grid steps when B > 8 (v7x megacore,
    # overlapped x-tile DMA); capped at 256 for large B
    if B <= 8:
        TB = _round_up(max(B, 1), 8)
    elif B <= 256:
        TB = _round_up((B + 1) // 2, 8)
    else:
        TB = 256
    # K tile over D: multiple of 128 that divides D_pad, MXU-friendly, capped
    # so "x tile + W1 tile + resident head" stays well inside 64 MiB VMEM
    if D_pad <= 512:
        TK = D_pad
    else:
        TK = next(c for c in (512, 384, 256, 128) if D_pad % c == 0)
    return TB, TK


def _const_spec(shape, single_buffer):
    # invariant operands: single-buffer to halve their VMEM footprint
    if single_buffer and hasattr(pl, "Buffered"):
        return pl.BlockSpec(shape, lambda i, k: (0, 0),
                            pipeline_mode=pl.Buffered(1))
    return pl.BlockSpec(shape, lambda i, k: (0, 0))


def _pallas_forward(x2d, prep, TB, TK, single_buffer_weights):
    B_pad, D_pad = x2d.shape
    Hd_pad, n_pad = prep["Hd_pad"], prep["n_pad"]
    grid = (B_pad // TB, D_pad // TK)

    # VMEM budget from the actual tile footprint (with headroom), capped at the
    # smallest physical VMEM across generations (v7x: 64 MiB / TC).
    vmem_bytes = (2 * TB * TK * 4              # x tiles (f32, double-buffered)
                  + 2 * TK * Hd_pad * 2        # W1 K-tiles (bf16)
                  + 2 * Hd_pad * n_pad * 2     # W2 (headroom even if Buffered(1))
                  + 8 * Hd_pad * 4 + 8 * n_pad * 4   # biases
                  + 2 * TB * n_pad * 4         # out tiles
                  + TB * Hd_pad * 4)           # h1 accumulator scratch
    vmem_limit = int(min(max(vmem_bytes * 3 // 2, 32 * 1024 * 1024),
                         64 * 1024 * 1024))

    cost = pl.CostEstimate(
        flops=2 * B_pad * D_pad * Hd_pad + 2 * B_pad * Hd_pad * n_pad,
        transcendentals=B_pad * n_pad,
        bytes_accessed=(B_pad * D_pad * 4 + D_pad * Hd_pad * 2
                        + Hd_pad * n_pad * 2 + B_pad * n_pad * 4),
    )

    kernel = functools.partial(predictor_kernel,
                               num_preds=prep["num_preds"],
                               num_modes=prep["num_modes"])

    return pl.pallas_call(
        kernel,
        grid=grid,
        in_specs=[
            pl.BlockSpec((TB, TK), lambda i, k: (i, k)),          # x batch/K tile
            pl.BlockSpec((TK, Hd_pad), lambda i, k: (k, 0)),      # W1 K tile
            _const_spec((1, Hd_pad), single_buffer_weights),      # b1 (resident)
            _const_spec((Hd_pad, n_pad), single_buffer_weights),  # fused head W2
            _const_spec((1, n_pad), single_buffer_weights),       # fused head b2
        ],
        out_specs=pl.BlockSpec((TB, n_pad), lambda i, k: (i, 0)),
        out_shape=jax.ShapeDtypeStruct((B_pad, n_pad), jnp.float32),
        scratch_shapes=[pltpu.VMEM((TB, Hd_pad), jnp.float32)],   # h1 accumulator
        compiler_params=pltpu.CompilerParams(
            dimension_semantics=("parallel", "arbitrary"),
            vmem_limit_bytes=vmem_limit),
        cost_estimate=cost,
    )(x2d, prep["W1"], prep["b1"], prep["W2"], prep["b2"])


def lyft_multi_model_predictor(x, prep):
    """Fused Pallas forward. Returns (pred, confidences).

    x: (B, C, H, W) float32 (NCHW, as in PyTorch)
    pred: (B, num_modes, future_len, 2)   confidences: (B, num_modes)
    """
    B = x.shape[0]
    num_modes, future_len = prep["num_modes"], prep["future_len"]
    num_preds = prep["num_preds"]
    D, D_pad = prep["D"], prep["D_pad"]

    x2d = x.reshape(B, -1)                    # NCHW flatten (glue)
    assert x2d.shape[1] == D
    if x2d.dtype != jnp.float32:
        x2d = x2d.astype(jnp.float32)

    TB, TK = _pick_tiles(B, D_pad)
    B_pad = _round_up(B, TB)
    if (B_pad, D_pad) != x2d.shape:
        # TODO(synk): when D is not 128-aligned at real backbone sizes, use a
        # pl.BoundedSlice K block instead of this zero-pad HBM pass over x.
        x2d = jnp.pad(x2d, ((0, B_pad - B), (0, D_pad - D)))

    try:
        out = _pallas_forward(x2d, prep, TB, TK, single_buffer_weights=True)
    except Exception:  # pl.Buffered(1) unsupported on this JAX -> default bufs
        out = _pallas_forward(x2d, prep, TB, TK, single_buffer_weights=False)

    out = out[:B]
    pred = out[:, :num_preds].reshape(B, num_modes, future_len, 2)     # glue
    conf = out[:, num_preds:num_preds + num_modes]
    return pred, conf


def _reference(x, params, target_scale, num_modes, future_len):
    # pure-f32 plain-JAX reference (PyTorch semantics, no folding / padding)
    B = x.shape[0]
    num_preds = 2 * future_len * num_modes
    x_flat = x.reshape(B, -1)
    h1 = jnp.maximum(x_flat @ params["W1"] + params["b1"], 0.0)
    h = h1 @ params["W2"] + params["b2"]
    pred = h[:, :num_preds].reshape(B, num_modes, future_len, 2)
    pred = pred * target_scale[None, None, :, :]
    conf = jax.nn.softmax(h[:, num_preds:], axis=1)
    return pred, conf


if __name__ == "__main__":
    # small config consistent with the module
    B, C, H, W = 2, 4, 16, 16
    hidden = 32
    num_modes = 3
    future_len = 8
    num_preds = 2 * future_len * num_modes
    out_dim = num_preds + num_modes                  # = 51

    key = jax.random.PRNGKey(0)
    kx, k1, k2, k3, k4, k5 = jax.random.split(key, 6)

    x = jax.random.normal(kx, (B, C, H, W), dtype=jnp.float32)

    D = C * H * W
    params = {
        "W1": jax.random.normal(k1, (D, hidden), dtype=jnp.float32) * 0.02,
        "b1": jax.random.normal(k2, (1, hidden), dtype=jnp.float32) * 0.1,
        "W2": jax.random.normal(k3, (hidden, out_dim), dtype=jnp.float32) * 0.1,
        "b2": jax.random.normal(k4, (1, out_dim), dtype=jnp.float32) * 0.1,
    }
    target_scale = 1.0 + jax.random.uniform(k5, (future_len, 2), dtype=jnp.float32)

    # one-time parameter prep (bf16 cast, padding, target_scale folding)
    prep = prepare_predictor_params(params, target_scale, num_modes, future_len)

    pred, conf = lyft_multi_model_predictor(x, prep)
    pred, conf = jax.block_until_ready((pred, conf))

    # sanity checks (bf16 MXU operands -> bf16-appropriate tolerances vs f32 ref)
    pred_ref, conf_ref = _reference(x, params, target_scale, num_modes, future_len)
    assert pred.shape == (B, num_modes, future_len, 2)
    assert conf.shape == (B, num_modes)
    assert jnp.allclose(pred, pred_ref, atol=5e-2, rtol=5e-2)
    assert jnp.allclose(conf, conf_ref, atol=5e-2, rtol=5e-2)
    assert jnp.allclose(jnp.sum(conf, axis=1), 1.0, atol=1e-5)

    print("KERNEL_OK")
</pallas_src>

<mosaic_0001>
module attributes {stable_mosaic.version = 11 : i64} {
  func.func @predictor_kernel(%arg0: i32, %arg1: i32, %arg2: memref<8x512xf32, #tpu.memory_space<vmem>>, %arg3: memref<512x256xbf16, #tpu.memory_space<vmem>>, %arg4: memref<1x256xf32, #tpu.memory_space<vmem>>, %arg5: memref<256x128xbf16, #tpu.memory_space<vmem>>, %arg6: memref<1x128xf32, #tpu.memory_space<vmem>>, %arg7: memref<8x128xf32, #tpu.memory_space<vmem>>, %arg8: memref<8x256xf32, #tpu.memory_space<vmem>>) attributes {dimension_semantics = [#tpu.dimension_semantics<parallel>, #tpu.dimension_semantics<arbitrary>], iteration_bounds = array<i64: 1, 2>, scalar_prefetch = 0 : i64, scratch_operands = 1 : i64, tpu.core_type = #tpu.core_type<tc>, window_params = [{transform_indices = @transform_0, window_bounds = array<i64: 8, 512>}, {transform_indices = @transform_1, window_bounds = array<i64: 512, 256>}, {pipeline_mode = #tpu.pipeline_mode<synchronous>, transform_indices = @transform_2, window_bounds = array<i64: 1, 256>}, {pipeline_mode = #tpu.pipeline_mode<synchronous>, transform_indices = @transform_3, window_bounds = array<i64: 256, 128>}, {pipeline_mode = #tpu.pipeline_mode<synchronous>, transform_indices = @transform_4, window_bounds = array<i64: 1, 128>}, {transform_indices = @transform_5, window_bounds = array<i64: 8, 128>}]} {
    %c0_i32 = arith.constant 0 : i32
    %0 = arith.cmpi eq, %arg1, %c0_i32 : i32
    %1 = arith.extui %0 : i1 to i32
    %c0_i32_0 = arith.constant 0 : i32
    %2 = arith.cmpi ne, %1, %c0_i32_0 : i32
    scf.if %2 {
      %cst_9 = arith.constant 0.000000e+00 : f32
      %13 = vector.broadcast %cst_9 : f32 to vector<8x256xf32>
      %c0_10 = arith.constant 0 : index
      %c0_11 = arith.constant 0 : index
      %14 = vector.load %arg8[%c0_10, %c0_11] : memref<8x256xf32, #tpu.memory_space<vmem>>, vector<8x256xf32>
      tpu.vector_store %arg8[%c0_10, %c0_11], %13 {strides = array<i32>} : memref<8x256xf32, #tpu.memory_space<vmem>>, vector<8x256xf32>,
    } else {
    }
    %c0 = arith.constant 0 : index
    %c0_1 = arith.constant 0 : index
    %3 = vector.load %arg8[%c0, %c0_1] : memref<8x256xf32, #tpu.memory_space<vmem>>, vector<8x256xf32>
    %c0_2 = arith.constant 0 : index
    %c0_3 = arith.constant 0 : index
    %4 = vector.load %arg2[%c0_2, %c0_3] : memref<8x512xf32, #tpu.memory_space<vmem>>, vector<8x512xf32>
    %5 = arith.truncf %4 : vector<8x512xf32> to vector<8x512xbf16>
    %c0_4 = arith.constant 0 : index
    %c0_5 = arith.constant 0 : index
    %6 = vector.load %arg3[%c0_4, %c0_5] : memref<512x256xbf16, #tpu.memory_space<vmem>>, vector<512x256xbf16>
    %cst = arith.constant dense<0.000000e+00> : vector<8x256xf32>
    %7 = tpu.matmul %5, %6, %cst {dimension_numbers = #tpu.dot_dimension_numbers<[1], [0], [0], [1], [0, 0, 1, 1], [], []>} : vector<8x512xbf16>, vector<512x256xbf16>, vector<8x256xf32> -> vector<8x256xf32>
    %8 = arith.addf %3, %7 : vector<8x256xf32>
    %c0_6 = arith.constant 0 : index
    %c0_7 = arith.constant 0 : index
    %9 = vector.load %arg8[%c0_6, %c0_7] : memref<8x256xf32, #tpu.memory_space<vmem>>, vector<8x256xf32>
    tpu.vector_store %arg8[%c0_6, %c0_7], %8 {strides = array<i32>} : memref<8x256xf32, #tpu.memory_space<vmem>>, vector<8x256xf32>,
    %c1_i32 = arith.constant 1 : i32
    %10 = arith.cmpi eq, %arg1, %c1_i32 : i32
    %11 = arith.extui %10 : i1 to i32
    %c0_i32_8 = arith.constant 0 : i32
    %12 = arith.cmpi ne, %11, %c0_i32_8 : i32
    scf.if %12 {
      %c0_9 = arith.constant 0 : index
      %c0_10 = arith.constant 0 : index
      %13 = vector.load %arg8[%c0_9, %c0_10] : memref<8x256xf32, #tpu.memory_space<vmem>>, vector<8x256xf32>
      %c0_11 = arith.constant 0 : index
      %c0_12 = arith.constant 0 : index
      %14 = vector.load %arg4[%c0_11, %c0_12] : memref<1x256xf32, #tpu.memory_space<vmem>>, vector<1x256xf32>
      %15 = vector.broadcast %14 : vector<1x256xf32> to vector<8x256xf32>
      %16 = arith.addf %13, %15 : vector<8x256xf32>
      %cst_13 = arith.constant 0.000000e+00 : f32
      %17 = vector.broadcast %cst_13 : f32 to vector<8x256xf32>
      %18 = arith.maximumf %16, %17 : vector<8x256xf32>
      %19 = arith.truncf %18 : vector<8x256xf32> to vector<8x256xbf16>
      %c0_14 = arith.constant 0 : index
      %c0_15 = arith.constant 0 : index
      %20 = vector.load %arg5[%c0_14, %c0_15] : memref<256x128xbf16, #tpu.memory_space<vmem>>, vector<256x128xbf16>
      %cst_16 = arith.constant dense<0.000000e+00> : vector<8x128xf32>
      %21 = tpu.matmul %19, %20, %cst_16 {dimension_numbers = #tpu.dot_dimension_numbers<[1], [0], [0], [1], [0, 0, 1, 1], [], []>} : vector<8x256xbf16>, vector<256x128xbf16>, vector<8x128xf32> -> vector<8x128xf32>
      %c0_17 = arith.constant 0 : index
      %c0_18 = arith.constant 0 : index
      %22 = vector.load %arg6[%c0_17, %c0_18] : memref<1x128xf32, #tpu.memory_space<vmem>>, vector<1x128xf32>
      %23 = vector.broadcast %22 : vector<1x128xf32> to vector<8x128xf32>
      %24 = arith.addf %21, %23 : vector<8x128xf32>
      %25 = tpu.iota {dimensions = array<i32: 1>} : vector<8x128xi32>
      %c48_i32 = arith.constant 48 : i32
      %26 = vector.broadcast %c48_i32 : i32 to vector<8x128xi32>
      %27 = arith.cmpi sge, %25, %26 : vector<8x128xi32>
      %c51_i32 = arith.constant 51 : i32
      %28 = vector.broadcast %c51_i32 : i32 to vector<8x128xi32>
      %29 = arith.cmpi slt, %25, %28 : vector<8x128xi32>
      %30 = arith.andi %27, %29 : vector<8x128xi1>
      %cst_19 = arith.constant -1.000000e+30 : f32
      %31 = vector.broadcast %cst_19 : f32 to vector<8x128xf32>
      %32 = arith.select %30, %24, %31 : vector<8x128xi1>, vector<8x128xf32>
      %cst_20 = arith.constant dense<0xFF800000> : vector<8xf32>
      %33 = vector.multi_reduction <maximumf>, %32, %cst_20 [1] : vector<8x128xf32> to vector<8xf32>
      %34 = vector.shape_cast %33 : vector<8xf32> to vector<8x1xf32>
      %35 = vector.broadcast %34 : vector<8x1xf32> to vector<8x128xf32>
      %36 = arith.subf %32, %35 : vector<8x128xf32>
      %37 = math.exp %36 : vector<8x128xf32>
      %cst_21 = arith.constant dense<0.000000e+00> : vector<8xf32>
      %38 = vector.multi_reduction <add>, %37, %cst_21 [1] : vector<8x128xf32> to vector<8xf32>
      %39 = vector.shape_cast %38 : vector<8xf32> to vector<8x1xf32>
      %40 = tpu.reciprocal %39 : vector<8x1xf32> -> vector<8x1xf32>
      %41 = vector.broadcast %40 : vector<8x1xf32> to vector<8x128xf32>
      %42 = arith.mulf %37, %41 : vector<8x128xf32>
      %43 = arith.select %30, %42, %24 : vector<8x128xi1>, vector<8x128xf32>
      %c0_22 = arith.constant 0 : index
      %c0_23 = arith.constant 0 : index
      %44 = vector.load %arg7[%c0_22, %c0_23] : memref<8x128xf32, #tpu.memory_space<vmem>>, vector<8x128xf32>
      tpu.vector_store %arg7[%c0_22, %c0_23], %43 {strides = array<i32>} : memref<8x128xf32, #tpu.memory_space<vmem>>, vector<8x128xf32>,
    } else {
    }
    return
  }
  func.func @transform_0(%arg0: i32, %arg1: i32) -> (i32, i32) {
    %c0_i32 = arith.constant 0 : i32
    return %arg0, %arg1 : i32, i32
  }
  func.func @transform_1(%arg0: i32, %arg1: i32) -> (i32, i32) {
    %c0_i32 = arith.constant 0 : i32
    %c0_i32_0 = arith.constant 0 : i32
    return %arg1, %c0_i32 : i32, i32
  }
  func.func @transform_2(%arg0: i32, %arg1: i32) -> (i32, i32) {
    %c0_i32 = arith.constant 0 : i32
    %c0_i32_0 = arith.constant 0 : i32
    %c0_i32_1 = arith.constant 0 : i32
    return %c0_i32, %c0_i32_0 : i32, i32
  }
  func.func @transform_3(%arg0: i32, %arg1: i32) -> (i32, i32) {
    %c0_i32 = arith.constant 0 : i32
    %c0_i32_0 = arith.constant 0 : i32
    %c0_i32_1 = arith.constant 0 : i32
    return %c0_i32, %c0_i32_0 : i32, i32
  }
  func.func @transform_4(%arg0: i32, %arg1: i32) -> (i32, i32) {
    %c0_i32 = arith.constant 0 : i32
    %c0_i32_0 = arith.constant 0 : i32
    %c0_i32_1 = arith.constant 0 : i32
    return %c0_i32, %c0_i32_0 : i32, i32
  }
  func.func @transform_5(%arg0: i32, %arg1: i32) -> (i32, i32) {
    %c0_i32 = arith.constant 0 : i32
    %c0_i32_0 = arith.constant 0 : i32
    return %arg0, %c0_i32 : i32, i32
  }
}

module attributes {stable_mosaic.version = 11 : i64} {
  func.func @predictor_kernel(%arg0: i32, %arg1: i32, %arg2: memref<8x512xf32, #tpu.memory_space<vmem>>, %arg3: memref<512x256xbf16, #tpu.memory_space<vmem>>, %arg4: memref<1x256xf32, #tpu.memory_space<vmem>>, %arg5: memref<256x128xbf16, #tpu.memory_space<vmem>>, %arg6: memref<1x128xf32, #tpu.memory_space<vmem>>, %arg7: memref<8x128xf32, #tpu.memory_space<vmem>>, %arg8: memref<8x256xf32, #tpu.memory_space<vmem>>) attributes {dimension_semantics = [#tpu.dimension_semantics<parallel>, #tpu.dimension_semantics<arbitrary>], iteration_bounds = array<i64: 1, 2>, scalar_prefetch = 0 : i64, scratch_operands = 1 : i64, tpu.core_type = #tpu.core_type<tc>, window_params = [{transform_indices = @transform_0, window_bounds = array<i64: 8, 512>}, {transform_indices = @transform_1, window_bounds = array<i64: 512, 256>}, {pipeline_mode = #tpu.pipeline_mode<synchronous>, transform_indices = @transform_2, window_bounds = array<i64: 1, 256>}, {pipeline_mode = #tpu.pipeline_mode<synchronous>, transform_indices = @transform_3, window_bounds = array<i64: 256, 128>}, {pipeline_mode = #tpu.pipeline_mode<synchronous>, transform_indices = @transform_4, window_bounds = array<i64: 1, 128>}, {transform_indices = @transform_5, window_bounds = array<i64: 8, 128>}]} {
    %c0_i32 = arith.constant 0 : i32
    %0 = arith.cmpi eq, %arg1, %c0_i32 : i32
    %1 = arith.extui %0 : i1 to i32
    %c0_i32_0 = arith.constant 0 : i32
    %2 = arith.cmpi ne, %1, %c0_i32_0 : i32
    scf.if %2 {
      %cst_9 = arith.constant 0.000000e+00 : f32
      %13 = vector.broadcast %cst_9 : f32 to vector<8x256xf32>
      %c0_10 = arith.constant 0 : index
      %c0_11 = arith.constant 0 : index
      %14 = vector.load %arg8[%c0_10, %c0_11] : memref<8x256xf32, #tpu.memory_space<vmem>>, vector<8x256xf32>
      tpu.vector_store %arg8[%c0_10, %c0_11], %13 {strides = array<i32>} : memref<8x256xf32, #tpu.memory_space<vmem>>, vector<8x256xf32>,
    } else {
    }
    %c0 = arith.constant 0 : index
    %c0_1 = arith.constant 0 : index
    %3 = vector.load %arg8[%c0, %c0_1] : memref<8x256xf32, #tpu.memory_space<vmem>>, vector<8x256xf32>
    %c0_2 = arith.constant 0 : index
    %c0_3 = arith.constant 0 : index
    %4 = vector.load %arg2[%c0_2, %c0_3] : memref<8x512xf32, #tpu.memory_space<vmem>>, vector<8x512xf32>
    %5 = arith.truncf %4 : vector<8x512xf32> to vector<8x512xbf16>
    %c0_4 = arith.constant 0 : index
    %c0_5 = arith.constant 0 : index
    %6 = vector.load %arg3[%c0_4, %c0_5] : memref<512x256xbf16, #tpu.memory_space<vmem>>, vector<512x256xbf16>
    %cst = arith.constant dense<0.000000e+00> : vector<8x256xf32>
    %7 = tpu.matmul %5, %6, %cst {dimension_numbers = #tpu.dot_dimension_numbers<[1], [0], [0], [1], [0, 0, 1, 1], [], []>} : vector<8x512xbf16>, vector<512x256xbf16>, vector<8x256xf32> -> vector<8x256xf32>
    %8 = arith.addf %3, %7 : vector<8x256xf32>
    %c0_6 = arith.constant 0 : index
    %c0_7 = arith.constant 0 : index
    %9 = vector.load %arg8[%c0_6, %c0_7] : memref<8x256xf32, #tpu.memory_space<vmem>>, vector<8x256xf32>
    tpu.vector_store %arg8[%c0_6, %c0_7], %8 {strides = array<i32>} : memref<8x256xf32, #tpu.memory_space<vmem>>, vector<8x256xf32>,
    %c1_i32 = arith.constant 1 : i32
    %10 = arith.cmpi eq, %arg1, %c1_i32 : i32
    %11 = arith.extui %10 : i1 to i32
    %c0_i32_8 = arith.constant 0 : i32
    %12 = arith.cmpi ne, %11, %c0_i32_8 : i32
    scf.if %12 {
      %c0_9 = arith.constant 0 : index
      %c0_10 = arith.constant 0 : index
      %13 = vector.load %arg8[%c0_9, %c0_10] : memref<8x256xf32, #tpu.memory_space<vmem>>, vector<8x256xf32>
      %c0_11 = arith.constant 0 : index
      %c0_12 = arith.constant 0 : index
      %14 = vector.load %arg4[%c0_11, %c0_12] : memref<1x256xf32, #tpu.memory_space<vmem>>, vector<1x256xf32>
      %15 = vector.broadcast %14 : vector<1x256xf32> to vector<8x256xf32>
      %16 = arith.addf %13, %15 : vector<8x256xf32>
      %cst_13 = arith.constant 0.000000e+00 : f32
      %17 = vector.broadcast %cst_13 : f32 to vector<8x256xf32>
      %18 = arith.maximumf %16, %17 : vector<8x256xf32>
      %19 = arith.truncf %18 : vector<8x256xf32> to vector<8x256xbf16>
      %c0_14 = arith.constant 0 : index
      %c0_15 = arith.constant 0 : index
      %20 = vector.load %arg5[%c0_14, %c0_15] : memref<256x128xbf16, #tpu.memory_space<vmem>>, vector<256x128xbf16>
      %cst_16 = arith.constant dense<0.000000e+00> : vector<8x128xf32>
      %21 = tpu.matmul %19, %20, %cst_16 {dimension_numbers = #tpu.dot_dimension_numbers<[1], [0], [0], [1], [0, 0, 1, 1], [], []>} : vector<8x256xbf16>, vector<256x128xbf16>, vector<8x128xf32> -> vector<8x128xf32>
      %c0_17 = arith.constant 0 : index
      %c0_18 = arith.constant 0 : index
      %22 = vector.load %arg6[%c0_17, %c0_18] : memref<1x128xf32, #tpu.memory_space<vmem>>, vector<1x128xf32>
      %23 = vector.broadcast %22 : vector<1x128xf32> to vector<8x128xf32>
      %24 = arith.addf %21, %23 : vector<8x128xf32>
      %25 = tpu.iota {dimensions = array<i32: 1>} : vector<8x128xi32>
      %c48_i32 = arith.constant 48 : i32
      %26 = vector.broadcast %c48_i32 : i32 to vector<8x128xi32>
      %27 = arith.cmpi sge, %25, %26 : vector<8x128xi32>
      %c51_i32 = arith.constant 51 : i32
      %28 = vector.broadcast %c51_i32 : i32 to vector<8x128xi32>
      %29 = arith.cmpi slt, %25, %28 : vector<8x128xi32>
      %30 = arith.andi %27, %29 : vector<8x128xi1>
      %cst_19 = arith.constant -1.000000e+30 : f32
      %31 = vector.broadcast %cst_19 : f32 to vector<8x128xf32>
      %32 = arith.select %30, %24, %31 : vector<8x128xi1>, vector<8x128xf32>
      %cst_20 = arith.constant dense<0xFF800000> : vector<8xf32>
      %33 = vector.multi_reduction <maximumf>, %32, %cst_20 [1] : vector<8x128xf32> to vector<8xf32>
      %34 = vector.shape_cast %33 : vector<8xf32> to vector<8x1xf32>
      %35 = vector.broadcast %34 : vector<8x1xf32> to vector<8x128xf32>
      %36 = arith.subf %32, %35 : vector<8x128xf32>
      %37 = math.exp %36 : vector<8x128xf32>
      %cst_21 = arith.constant dense<0.000000e+00> : vector<8xf32>
      %38 = vector.multi_reduction <add>, %37, %cst_21 [1] : vector<8x128xf32> to vector<8xf32>
      %39 = vector.shape_cast %38 : vector<8xf32> to vector<8x1xf32>
      %40 = tpu.reciprocal %39 : vector<8x1xf32> -> vector<8x1xf32>
      %41 = vector.broadcast %40 : vector<8x1xf32> to vector<8x128xf32>
      %42 = arith.mulf %37, %41 : vector<8x128xf32>
      %43 = arith.select %30, %42, %24 : vector<8x128xi1>, vector<8x128xf32>
      %c0_22 = arith.constant 0 : index
      %c0_23 = arith.constant 0 : index
      %44 = vector.load %arg7[%c0_22, %c0_23] : memref<8x128xf32, #tpu.memory_space<vmem>>, vector<8x128xf32>
      tpu.vector_store %arg7[%c0_22, %c0_23], %43 {strides = array<i32>} : memref<8x128xf32, #tpu.memory_space<vmem>>, vector<8x128xf32>,
    } else {
    }
    return
  }
  func.func @transform_0(%arg0: i32, %arg1: i32) -> (i32, i32) {
    %c0_i32 = arith.constant 0 : i32
    return %arg0, %arg1 : i32, i32
  }
  func.func @transform_1(%arg0: i32, %arg1: i32) -> (i32, i32) {
    %c0_i32 = arith.constant 0 : i32
    %c0_i32_0 = arith.constant 0 : i32
    return %arg1, %c0_i32 : i32, i32
  }
  func.func @transform_2(%arg0: i32, %arg1: i32) -> (i32, i32) {
    %c0_i32 = arith.constant 0 : i32
    %c0_i32_0 = arith.constant 0 : i32
    %c0_i32_1 = arith.constant 0 : i32
    return %c0_i32, %c0_i32_0 : i32, i32
  }
  func.func @transform_3(%arg0: i32, %arg1: i32) -> (i32, i32) {
    %c0_i32 = arith.constant 0 : i32
    %c0_i32_0 = arith.constant 0 : i32
    %c0_i32_1 = arith.constant 0 : i32
    return %c0_i32, %c0_i32_0 : i32, i32
  }
  func.func @transform_4(%arg0: i32, %arg1: i32) -> (i32, i32) {
    %c0_i32 = arith.constant 0 : i32
    %c0_i32_0 = arith.constant 0 : i32
    %c0_i32_1 = arith.constant 0 : i32
    return %c0_i32, %c0_i32_0 : i32, i32
  }
  func.func @transform_5(%arg0: i32, %arg1: i32) -> (i32, i32) {
    %c0_i32 = arith.constant 0 : i32
    %c0_i32_0 = arith.constant 0 : i32
    return %arg0, %c0_i32 : i32, i32
  }
}

</mosaic_0001>

<llo_original>
// kernel: tpu_custom_call.1
$region0: #{tpu_custom_call.1}
  #allocation0 [shape = 'u32[]', space=smem, size = 0x4, offset = 0x4, fixed_abs, tag = 'smem constant byte address 0x4 - core index']
  #allocation1 [shape = 'u32[72,128]{1,0:T(1,128)}', space=vmem, size = 0x9000, scoped, tag = 'internal scratch']
  #allocation2 [shape = 'f32[8,256]{1,0:T(8,128)}', space=vmem, size = 0x2000, scoped, tag = 'scratch operand']
  %s0 = inlined_call_operand.hbm [shape: f32[8,1024], index: 0, kind: input, shape index: {}]
  %s1 = inlined_call_operand.hbm [shape: bf16[1024,256], index: 1, kind: input, shape index: {}]
  %s2 = inlined_call_operand.hbm [shape: f32[1,256], index: 2, kind: input, shape index: {}]
  %s3 = inlined_call_operand.hbm [shape: bf16[256,128], index: 3, kind: input, shape index: {}]
  %s4 = inlined_call_operand.vmem [shape: f32[1,128], index: 4, kind: input, shape index: {}]
  %s5 = inlined_call_operand.hbm [shape: f32[8,128], index: 5, kind: output, shape index: {}]
  %s6 = sld [smem:[#allocation0]]
  $region77: #{tpu_custom_call.1} parent=0
    _
  %s8 = ssub.s32 1, %s6
  %s9 = scalar_select 0, %s8, %s6
  $region1: #{tpu_custom_call.1} parent=0
    #allocation3 [shape = 'u8[32768]{0}', space=vmem, size = 0x8000, scoped, tag = 'input window, operand 0']
    #allocation4 [shape = 's32[2]{0}', space=sflag, size = 0x8, scoped, tag = 'scoped memory for tpu_custom_call.1']
    #allocation5 [shape = 's32[2]{0}', space=sflag, size = 0x8, scoped, tag = 'scoped memory for tpu_custom_call.1']
    #allocation6 [shape = 'u8[524288]{0}', space=vmem, size = 0x80000, scoped, tag = 'input window, operand 1']
    #allocation7 [shape = 's32[2]{0}', space=sflag, size = 0x8, scoped, tag = 'scoped memory for tpu_custom_call.1']
    #allocation8 [shape = 'u8[1024]{0}', space=vmem, size = 0x400, scoped, tag = 'input window, operand 2, single buffered']
    #allocation9 [shape = 'u8[65536]{0}', space=vmem, size = 0x10000, scoped, tag = 'input window, operand 3, single buffered']
    #allocation10 [shape = 's32[1]{0}', space=sflag, size = 0x4, scoped, tag = 'scoped memory for tpu_custom_call.1']
    #allocation11 [shape = 'u8[4096]{0}', space=vmem, size = 0x1000, scoped, tag = 'output window, operand 0, single buffered']
    %10 = vsyncpa [#allocation4], 0
    %s11 = scalar_lea.sflag [#allocation4], 1
    %12 = vsyncpa %s11, 0
    %13 = vsyncpa [#allocation7], 0
    %s14 = scalar_lea.sflag [#allocation7], 1
    %15 = vsyncpa %s14, 0
    %16 = vsyncpa [#allocation10], 0
    %17 = vsyncpa [#allocation5], 0
    loop: start=0, step=1, limit=4
    $region2: #{tpu_custom_call.1} parent=1 // loop_pre_header
      _
    $region3: #{tpu_custom_call.1} parent=1 // loop_header
      %s19 = sphi 0, %s23
      %p20 = scmp.ge.s32.totalorder %s19, 4
      %s26 = sphi 0, %s38
      %s27 = sphi 0, %s34
      %s28 = sphi 0, %s26
      %s29 = sphi 0, %s27
      %s30 = sphi 0, %s28
      %s31 = sphi 0, %s29
      %s43 = sphi 0, %s45
      %s46 = sphi 0, %s43
      %s47 = sphi 0, %s46
      %s63 = sphi 0, %s47
      %s69 = sphi 0, %s71
      %s72 = sphi 0, %s69
      %s73 = sphi 0, %s72
      %s89 = sphi 0, %s73
      %s93 = sphi 0, %s93
      %s95 = sphi 0, %s93
      %s96 = sphi 0, %s95
      %s110 = sphi 0, %s96
      %s114 = sphi 0, %s114
      %s116 = sphi 0, %s114
      %s117 = sphi 0, %s116
      %s131 = sphi 0, %s117
      %s135 = sphi 0, %s135
      %s137 = sphi 0, %s135
      %s138 = sphi 0, %s137
      %s152 = sphi 0, %s138
      %s158 = sphi 0, %s160
      %s161 = sphi 0, %s158
      %s162 = sphi 0, %s161
      %s178 = sphi 0, %s162
    $region4: #{tpu_custom_call.1} parent=1 // loop_header_branch
      %22 = sbr.rel (%p20) target = $region8
    $region5: #{tpu_custom_call.1} parent=1 // loop_body
      %s24 = ssub.s32 %s19, 1
      %s25 = ssub.s32 %s19, 2
      %s32 = sadd.s32 1, %s27
      %p33 = scmp.ge.s32.totalorder %s32, 2
      %s34 = scalar_select %p33, 0, %s32
      %s35 = sadd.s32 1, %s26
      %s36 = scalar_select %p33, %s35, %s26
      %p37 = scmp.ge.s32.totalorder %s36, 1
      %s38 = scalar_select %p37, 0, %s36
      %s39 = ssub.s32 %s26, %s38
      %s40 = ssub.s32 %s27, %s34
      %s41 = sor.u32 %s39, %s40
      %p42 = scmp.eq.s32.totalorder %s41, 0
      %s44 = sadd.s32 %s43, 1
      %s45 = scalar_select %p42, %s43, %s44
      %p48 = pneg %p42
      %p49 = scmp.eq.s32.totalorder %s19, 1
      %p50 = por %p48, %p49
      %p51 = scmp.ne.s32.totalorder %s43, %s46
      %p52 = scmp.eq.s32.totalorder %s19, 0
      %p53 = por %p51, %p52
      %p54 = scmp.ne.s32.totalorder %s43, %s46
      %p55 = scmp.eq.s32.totalorder %s24, 1
      %p56 = por %p54, %p55
      %p57 = scmp.ne.s32.totalorder %s46, %s47
      %p58 = scmp.eq.s32.totalorder %s24, 0
      %p59 = por %p57, %p58
      %p60 = scmp.ne.s32.totalorder %s46, %s47
      %p61 = scmp.eq.s32.totalorder %s25, 1
      %p62 = por %p60, %p61
      %p64 = scmp.ne.s32.totalorder %s47, %s63
      %p65 = scmp.eq.s32.totalorder %s25, 0
      %p66 = por %p64, %p65
      %s67 = ssub.s32 %s27, %s34
      %p68 = scmp.eq.s32.totalorder %s67, 0
      %s70 = sadd.s32 %s69, 1
      %s71 = scalar_select %p68, %s69, %s70
      %p74 = pneg %p68
      %p75 = scmp.eq.s32.totalorder %s19, 1
      %p76 = por %p74, %p75
      %p77 = scmp.ne.s32.totalorder %s69, %s72
      %p78 = scmp.eq.s32.totalorder %s19, 0
      %p79 = por %p77, %p78
      %p80 = scmp.ne.s32.totalorder %s69, %s72
      %p81 = scmp.eq.s32.totalorder %s24, 1
      %p82 = por %p80, %p81
      %p83 = scmp.ne.s32.totalorder %s72, %s73
      %p84 = scmp.eq.s32.totalorder %s24, 0
      %p85 = por %p83, %p84
      %p86 = scmp.ne.s32.totalorder %s72, %s73
      %p87 = scmp.eq.s32.totalorder %s25, 1
      %p88 = por %p86, %p87
      %p90 = scmp.ne.s32.totalorder %s73, %s89
      %p91 = scmp.eq.s32.totalorder %s25, 0
      %p92 = por %p90, %p91
      %s94 = sadd.s32 %s93, 1
      %p97 = scmp.eq.s32.totalorder %s19, 1
      %p98 = scmp.ne.s32.totalorder %s93, %s95
      %p99 = scmp.eq.s32.totalorder %s19, 0
      %p100 = por %p98, %p99
      %p101 = scmp.ne.s32.totalorder %s93, %s95
      %p102 = scmp.eq.s32.totalorder %s24, 1
      %p103 = por %p101, %p102
      %p104 = scmp.ne.s32.totalorder %s95, %s96
      %p105 = scmp.eq.s32.totalorder %s24, 0
      %p106 = por %p104, %p105
      %p107 = scmp.ne.s32.totalorder %s95, %s96
      %p108 = scmp.eq.s32.totalorder %s25, 1
      %p109 = por %p107, %p108
      %p111 = scmp.ne.s32.totalorder %s96, %s110
      %p112 = scmp.eq.s32.totalorder %s25, 0
      %p113 = por %p111, %p112
      %s115 = sadd.s32 %s114, 1
      %p118 = scmp.eq.s32.totalorder %s19, 1
      %p119 = scmp.ne.s32.totalorder %s114, %s116
      %p120 = scmp.eq.s32.totalorder %s19, 0
      %p121 = por %p119, %p120
      %p122 = scmp.ne.s32.totalorder %s114, %s116
      %p123 = scmp.eq.s32.totalorder %s24, 1
      %p124 = por %p122, %p123
      %p125 = scmp.ne.s32.totalorder %s116, %s117
      %p126 = scmp.eq.s32.totalorder %s24, 0
      %p127 = por %p125, %p126
      %p128 = scmp.ne.s32.totalorder %s116, %s117
      %p129 = scmp.eq.s32.totalorder %s25, 1
      %p130 = por %p128, %p129
      %p132 = scmp.ne.s32.totalorder %s117, %s131
      %p133 = scmp.eq.s32.totalorder %s25, 0
      %p134 = por %p132, %p133
      %s136 = sadd.s32 %s135, 1
      %p139 = scmp.eq.s32.totalorder %s19, 1
      %p140 = scmp.ne.s32.totalorder %s135, %s137
      %p141 = scmp.eq.s32.totalorder %s19, 0
      %p142 = por %p140, %p141
      %p143 = scmp.ne.s32.totalorder %s135, %s137
      %p144 = scmp.eq.s32.totalorder %s24, 1
      %p145 = por %p143, %p144
      %p146 = scmp.ne.s32.totalorder %s137, %s138
      %p147 = scmp.eq.s32.totalorder %s24, 0
      %p148 = por %p146, %p147
      %p149 = scmp.ne.s32.totalorder %s137, %s138
      %p150 = scmp.eq.s32.totalorder %s25, 1
      %p151 = por %p149, %p150
      %p153 = scmp.ne.s32.totalorder %s138, %s152
      %p154 = scmp.eq.s32.totalorder %s25, 0
      %p155 = por %p153, %p154
      %s156 = ssub.s32 %s26, %s38
      %p157 = scmp.eq.s32.totalorder %s156, 0
      %s159 = sadd.s32 %s158, 1
      %s160 = scalar_select %p157, %s158, %s159
      %p163 = pneg %p157
      %p164 = scmp.eq.s32.totalorder %s19, 1
      %p165 = por %p163, %p164
      %p166 = scmp.ne.s32.totalorder %s158, %s161
      %p167 = scmp.eq.s32.totalorder %s19, 0
      %p168 = por %p166, %p167
      %p169 = scmp.ne.s32.totalorder %s158, %s161
      %p170 = scmp.eq.s32.totalorder %s24, 1
      %p171 = por %p169, %p170
      %p172 = scmp.ne.s32.totalorder %s161, %s162
      %p173 = scmp.eq.s32.totalorder %s24, 0
      %p174 = por %p172, %p173
      %p175 = scmp.ne.s32.totalorder %s161, %s162
      %p176 = scmp.eq.s32.totalorder %s25, 1
      %p177 = por %p175, %p176
      %p179 = scmp.ne.s32.totalorder %s162, %s178
      %p180 = scmp.eq.s32.totalorder %s25, 0
      %p181 = por %p179, %p180
      %p182 = scmp.le.s32.totalorder 1, %s19
      %p183 = scmp.lt.s32.totalorder %s19, 3
      %p184 = pnand %p182, %p183
      %p185 = pneg %p184
      // Predicated region
      $region9: #{tpu_custom_call.1} parent=5 // pred_check
        _
      $region10: #{tpu_custom_call.1} parent=5 // pred_check_branch
        %187 = sbr.rel (%p184) target = $region12
      $region11: #{tpu_custom_call.1} parent=5 // pred_region
        %s188 = ssub.s32 %s19, 1
        // Predicated region
        $region13: #{tpu_custom_call.1} parent=11 // pred_check
          %p189 = pneg %p106
        $region14: #{tpu_custom_call.1} parent=11 // pred_check_branch
          %191 = sbr.rel (%p189) target = $region16
        $region15: #{tpu_custom_call.1} parent=11 // pred_region
          %193 = vsyncadd [#allocation7], 0
          %s195 = sshll.u32 %s2, 4
          %s196 = int_to_ptr.hbm [resolvable:$true] %s195
          %s197 = sshll.u32 [#allocation8], 4
          %s198 = int_to_ptr.vmem [resolvable:$true] %s197
          %200 = dma.hbm_to_vmem [thread:$0]  %s196, 32, %s198, [#allocation7]
        $region16: #{tpu_custom_call.1} parent=11 // pred_fallthru
          _
        // Predicated region
        $region17: #{tpu_custom_call.1} parent=11 // pred_check
          %p201 = pneg %p127
        $region18: #{tpu_custom_call.1} parent=11 // pred_check_branch
          %203 = sbr.rel (%p201) target = $region20
        $region19: #{tpu_custom_call.1} parent=11 // pred_region
          %205 = vsyncadd [#allocation10], 0
          %s206 = sshll.u32 %s3, 4
          %s207 = int_to_ptr.hbm [resolvable:$true] %s206
          %s208 = sshll.u32 [#allocation9], 4
          %s209 = int_to_ptr.vmem [resolvable:$true] %s208
          %214 = dma.hbm_to_vmem [thread:$0]  %s207, 2048, %s209, [#allocation10], 64, 64, 4
        $region20: #{tpu_custom_call.1} parent=11 // pred_fallthru
          _
        // Predicated region
        $region21: #{tpu_custom_call.1} parent=11 // pred_check
          %p215 = pneg %p148
        $region22: #{tpu_custom_call.1} parent=11 // pred_check_branch
          %217 = sbr.rel (%p215) target = $region24
        $region23: #{tpu_custom_call.1} parent=11 // pred_region
          _
        $region24: #{tpu_custom_call.1} parent=11 // pred_fallthru
          _
      $region12: #{tpu_custom_call.1} parent=5 // pred_fallthru
        _
      %p218 = scmp.lt.s32.totalorder %s19, 2
      // Predicated region
      $region25: #{tpu_custom_call.1} parent=5 // pred_check
        %p219 = pneg %p218
      $region26: #{tpu_custom_call.1} parent=5 // pred_check_branch
        %221 = sbr.rel (%p219) target = $region28
      $region27: #{tpu_custom_call.1} parent=5 // pred_region
        // Predicated region
        $region29: #{tpu_custom_call.1} parent=27 // pred_check
          %p222 = pneg %p53
        $region30: #{tpu_custom_call.1} parent=27 // pred_check_branch
          %224 = sbr.rel (%p222) target = $region32
        $region31: #{tpu_custom_call.1} parent=27 // pred_region
          %s225 = sand.u32 %s43, 1
          %s226 = scalar_lea.sflag [#allocation4], %s225
          %s227 = sand.u32 %s43, 1
          %s228 = smul.addr %s227, 32
          %s229 = scalar_lea.vmem [#allocation3], %s228
          %s230 = smul.u32 4, %s27
          %232 = vsyncadd %s226, 0
          %s233 = smul.addr %s26, 8
          %s234 = sadd.s32 %s230, %s233
          %s235 = smul.addr %s234, 8
          %s236 = scalar_lea.hbm %s0, %s235
          %s238 = sshll.u32 %s236, 4
          %s239 = int_to_ptr.hbm [resolvable:$true] %s238
          %s240 = sshll.u32 %s229, 4
          %s241 = int_to_ptr.vmem [resolvable:$true] %s240
          %243 = dma.hbm_to_vmem [thread:$0]  %s239, 512, %s241, %s226
        $region32: #{tpu_custom_call.1} parent=27 // pred_fallthru
          _
        // Predicated region
        $region33: #{tpu_custom_call.1} parent=27 // pred_check
          %p244 = pneg %p79
        $region34: #{tpu_custom_call.1} parent=27 // pred_check_branch
          %246 = sbr.rel (%p244) target = $region36
        $region35: #{tpu_custom_call.1} parent=27 // pred_region
          %s247 = sand.u32 %s19, 1
          %s248 = scalar_lea.sflag [#allocation7], %s247
          %s249 = sand.u32 %s69, 1
          %s250 = smul.addr %s249, 512
          %s251 = scalar_lea.vmem [#allocation6], %s250
          %s252 = smul.u32 64, %s27
          %254 = vsyncadd %s248, 0
          %s255 = smul.addr %s252, 2
          %s256 = smul.addr %s255, 4
          %s257 = scalar_lea.hbm %s1, %s256
          %s258 = sshll.u32 %s257, 4
          %s259 = int_to_ptr.hbm [resolvable:$true] %s258
          %s260 = sshll.u32 %s251, 4
          %s261 = int_to_ptr.vmem [resolvable:$true] %s260
          %266 = dma.hbm_to_vmem [thread:$0]  %s259, 8192, %s261, %s248, 128, 128, 8
        $region36: #{tpu_custom_call.1} parent=27 // pred_fallthru
          _
      $region28: #{tpu_custom_call.1} parent=5 // pred_fallthru
        _
      %p267 = scmp.le.s32.totalorder 1, %s19
      %p268 = scmp.lt.s32.totalorder %s19, 3
      %p269 = pnand %p267, %p268
      %p270 = pneg %p269
      // Predicated region
      $region37: #{tpu_custom_call.1} parent=5 // pred_check
        _
      $region38: #{tpu_custom_call.1} parent=5 // pred_check_branch
        %272 = sbr.rel (%p269) target = $region40
      $region39: #{tpu_custom_call.1} parent=5 // pred_region
        %s273 = ssub.s32 %s19, 1
        %s274 = sand.u32 %s46, 1
        %s275 = scalar_lea.sflag [#allocation4], %s274
        %s276 = sand.u32 %s46, 1
        %s277 = smul.addr %s276, 32
        %s278 = scalar_lea.vmem [#allocation3], %s277
        // Predicated region
        $region41: #{tpu_custom_call.1} parent=39 // pred_check
          %p279 = pneg %p59
        $region42: #{tpu_custom_call.1} parent=39 // pred_check_branch
          %281 = sbr.rel (%p279) target = $region44
        $region43: #{tpu_custom_call.1} parent=39 // pred_region
          %283 = dma.done %s275, 512
        $region44: #{tpu_custom_call.1} parent=39 // pred_fallthru
          _
        %s284 = sand.u32 %s24, 1
        %s285 = scalar_lea.sflag [#allocation7], %s284
        %s286 = sand.u32 %s72, 1
        %s287 = smul.addr %s286, 512
        %s288 = scalar_lea.vmem [#allocation6], %s287
        // Predicated region
        $region45: #{tpu_custom_call.1} parent=39 // pred_check
          %p289 = pneg %p85
        $region46: #{tpu_custom_call.1} parent=39 // pred_check_branch
          %291 = sbr.rel (%p289) target = $region48
        $region47: #{tpu_custom_call.1} parent=39 // pred_region
          %293 = dma.done %s285, 8192
        $region48: #{tpu_custom_call.1} parent=39 // pred_fallthru
          _
        // Predicated region
        $region49: #{tpu_custom_call.1} parent=39 // pred_check
          %p294 = pneg %p106
        $region50: #{tpu_custom_call.1} parent=39 // pred_check_branch
          %296 = sbr.rel (%p294) target = $region52
        $region51: #{tpu_custom_call.1} parent=39 // pred_region
          %298 = dma.done [#allocation7], 32
        $region52: #{tpu_custom_call.1} parent=39 // pred_fallthru
          _
        // Predicated region
        $region53: #{tpu_custom_call.1} parent=39 // pred_check
          %p299 = pneg %p127
        $region54: #{tpu_custom_call.1} parent=39 // pred_check_branch
          %301 = sbr.rel (%p299) target = $region56
        $region55: #{tpu_custom_call.1} parent=39 // pred_region
          %303 = dma.done [#allocation10], 2048
        $region56: #{tpu_custom_call.1} parent=39 // pred_fallthru
          _
        %s304 = sand.u32 %s46, 1
        %s305 = scalar_lea.sflag [#allocation4], %s304
        %s306 = sand.u32 %s46, 1
        %s307 = smul.addr %s306, 32
        %s308 = scalar_lea.vmem [#allocation3], %s307
        %p309 = pneg %p59
        %p310 = pneg %p56
        %s311 = sand.u32 %s24, 1
        %s312 = scalar_lea.sflag [#allocation7], %s311
        %s313 = sand.u32 %s72, 1
        %s314 = smul.addr %s313, 512
        %s315 = scalar_lea.vmem [#allocation6], %s314
        %p316 = pneg %p85
        %p317 = pneg %p82
        %p318 = pneg %p106
        %p319 = pneg %p103
        %p320 = pneg %p127
        %p321 = pneg %p124
        %p322 = pneg %p148
        %p323 = pneg %p145
        %p324 = pneg %p174
        %p325 = pneg %p171
        %s326 = smul.u32 4, %s29
        %s327 = smul.u32 64, %s29
        %p328 = scmp.eq.s32.totalorder %s29, 0
        // Predicated region
        $region57: #{tpu_custom_call.1} parent=39 // pred_check
          %p329 = pneg %p328
        $region58: #{tpu_custom_call.1} parent=39 // pred_check_branch
          %331 = sbr.rel (%p329) target = $region60
        $region59: #{tpu_custom_call.1} parent=39 // pred_region
          %332 = vst [vmem:[#allocation2] sm:$0xff] 0.0
          %333 = vst [vmem:[#allocation2 + $0x8] sm:$0xff] 0.0
        $region60: #{tpu_custom_call.1} parent=39 // pred_fallthru
          _
        %v334 = vld [vmem:[#allocation2] sm:$0xff]
        %v335 = vld [vmem:[#allocation2 + $0x8] sm:$0xff]
        %v336 = vld [vmem:[%s278] sm:$0xff]
        %v337 = vld [vmem:[%s278 + $0x8] sm:$0xff]
        %v338 = vld [vmem:[%s278 + $0x10] sm:$0xff]
        %v339 = vld [vmem:[%s278 + $0x18] sm:$0xff]
        %v340 = vpack.c.bf16 %v336, %v336
        %v341 = vpack.c.bf16 %v337, %v337
        %v342 = vpack.c.bf16 %v338, %v338
        %v343 = vpack.c.bf16 %v339, %v339
        %v344 = vld [vmem:[%s288] sm:$0xff]
        %v345 = vld [vmem:[%s288 + $0x8] sm:$0xff]
        %v346 = vld [vmem:[%s288 + $0x10] sm:$0xff]
        %v347 = vld [vmem:[%s288 + $0x18] sm:$0xff]
        %v348 = vld [vmem:[%s288 + $0x20] sm:$0xff]
        %v349 = vld [vmem:[%s288 + $0x28] sm:$0xff]
        %v350 = vld [vmem:[%s288 + $0x30] sm:$0xff]
        %v351 = vld [vmem:[%s288 + $0x38] sm:$0xff]
        %v352 = vld [vmem:[%s288 + $0x40] sm:$0xff]
        %v353 = vld [vmem:[%s288 + $0x48] sm:$0xff]
        %v354 = vld [vmem:[%s288 + $0x50] sm:$0xff]
        %v355 = vld [vmem:[%s288 + $0x58] sm:$0xff]
        %v356 = vld [vmem:[%s288 + $0x60] sm:$0xff]
        %v357 = vld [vmem:[%s288 + $0x68] sm:$0xff]
        %v358 = vld [vmem:[%s288 + $0x70] sm:$0xff]
        %v359 = vld [vmem:[%s288 + $0x78] sm:$0xff]
        %v360 = vld [vmem:[%s288 + $0x80] sm:$0xff]
        %v361 = vld [vmem:[%s288 + $0x88] sm:$0xff]
        %v362 = vld [vmem:[%s288 + $0x90] sm:$0xff]
        %v363 = vld [vmem:[%s288 + $0x98] sm:$0xff]
        %v364 = vld [vmem:[%s288 + $0xa0] sm:$0xff]
        %v365 = vld [vmem:[%s288 + $0xa8] sm:$0xff]
        %v366 = vld [vmem:[%s288 + $0xb0] sm:$0xff]
        %v367 = vld [vmem:[%s288 + $0xb8] sm:$0xff]
        %v368 = vld [vmem:[%s288 + $0xc0] sm:$0xff]
        %v369 = vld [vmem:[%s288 + $0xc8] sm:$0xff]
        %v370 = vld [vmem:[%s288 + $0xd0] sm:$0xff]
        %v371 = vld [vmem:[%s288 + $0xd8] sm:$0xff]
        %v372 = vld [vmem:[%s288 + $0xe0] sm:$0xff]
        %v373 = vld [vmem:[%s288 + $0xe8] sm:$0xff]
        %v374 = vld [vmem:[%s288 + $0xf0] sm:$0xff]
        %v375 = vld [vmem:[%s288 + $0xf8] sm:$0xff]
        %v376 = vld [vmem:[%s288 + $0x100] sm:$0xff]
        %v377 = vld [vmem:[%s288 + $0x108] sm:$0xff]
        %v378 = vld [vmem:[%s288 + $0x110] sm:$0xff]
        %v379 = vld [vmem:[%s288 + $0x118] sm:$0xff]
        %v380 = vld [vmem:[%s288 + $0x120] sm:$0xff]
        %v381 = vld [vmem:[%s288 + $0x128] sm:$0xff]
        %v382 = vld [vmem:[%s288 + $0x130] sm:$0xff]
        %v383 = vld [vmem:[%s288 + $0x138] sm:$0xff]
        %v384 = vld [vmem:[%s288 + $0x140] sm:$0xff]
        %v385 = vld [vmem:[%s288 + $0x148] sm:$0xff]
        %v386 = vld [vmem:[%s288 + $0x150] sm:$0xff]
        %v387 = vld [vmem:[%s288 + $0x158] sm:$0xff]
        %v388 = vld [vmem:[%s288 + $0x160] sm:$0xff]
        %v389 = vld [vmem:[%s288 + $0x168] sm:$0xff]
        %v390 = vld [vmem:[%s288 + $0x170] sm:$0xff]
        %v391 = vld [vmem:[%s288 + $0x178] sm:$0xff]
        %v392 = vld [vmem:[%s288 + $0x180] sm:$0xff]
        %v393 = vld [vmem:[%s288 + $0x188] sm:$0xff]
        %v394 = vld [vmem:[%s288 + $0x190] sm:$0xff]
        %v395 = vld [vmem:[%s288 + $0x198] sm:$0xff]
        %v396 = vld [vmem:[%s288 + $0x1a0] sm:$0xff]
        %v397 = vld [vmem:[%s288 + $0x1a8] sm:$0xff]
        %v398 = vld [vmem:[%s288 + $0x1b0] sm:$0xff]
        %v399 = vld [vmem:[%s288 + $0x1b8] sm:$0xff]
        %v400 = vld [vmem:[%s288 + $0x1c0] sm:$0xff]
        %v401 = vld [vmem:[%s288 + $0x1c8] sm:$0xff]
        %v402 = vld [vmem:[%s288 + $0x1d0] sm:$0xff]
        %v403 = vld [vmem:[%s288 + $0x1d8] sm:$0xff]
        %v404 = vld [vmem:[%s288 + $0x1e0] sm:$0xff]
        %v405 = vld [vmem:[%s288 + $0x1e8] sm:$0xff]
        %v406 = vld [vmem:[%s288 + $0x1f0] sm:$0xff]
        %v407 = vld [vmem:[%s288 + $0x1f8] sm:$0xff]
        %v472 = vunpack.c.l.b16 %v344
        %v473 = vunpack.c.h.b16 %v344
        %v474 = vunpack.c.l.b16 %v345
        %v475 = vunpack.c.h.b16 %v345
        %v476 = vunpack.c.l.b16 %v346
        %v477 = vunpack.c.h.b16 %v346
        %v478 = vunpack.c.l.b16 %v347
        %v479 = vunpack.c.h.b16 %v347
        %v480 = vunpack.c.l.b16 %v348
        %v481 = vunpack.c.h.b16 %v348
        %v482 = vunpack.c.l.b16 %v349
        %v483 = vunpack.c.h.b16 %v349
        %v484 = vunpack.c.l.b16 %v350
        %v485 = vunpack.c.h.b16 %v350
        %v486 = vunpack.c.l.b16 %v351
        %v487 = vunpack.c.h.b16 %v351
        %v488 = vunpack.c.l.b16 %v352
        %v489 = vunpack.c.h.b16 %v352
        %v490 = vunpack.c.l.b16 %v353
        %v491 = vunpack.c.h.b16 %v353
        %v492 = vunpack.c.l.b16 %v354
        %v493 = vunpack.c.h.b16 %v354
        %v494 = vunpack.c.l.b16 %v355
        %v495 = vunpack.c.h.b16 %v355
        %v496 = vunpack.c.l.b16 %v356
        %v497 = vunpack.c.h.b16 %v356
        %v498 = vunpack.c.l.b16 %v357
        %v499 = vunpack.c.h.b16 %v357
        %v500 = vunpack.c.l.b16 %v358
        %v501 = vunpack.c.h.b16 %v358
        %v502 = vunpack.c.l.b16 %v359
        %v503 = vunpack.c.h.b16 %v359
        %v504 = vunpack.c.l.b16 %v360
        %v505 = vunpack.c.h.b16 %v360
        %v506 = vunpack.c.l.b16 %v361
        %v507 = vunpack.c.h.b16 %v361
        %v508 = vunpack.c.l.b16 %v362
        %v509 = vunpack.c.h.b16 %v362
        %v510 = vunpack.c.l.b16 %v363
        %v511 = vunpack.c.h.b16 %v363
        %v512 = vunpack.c.l.b16 %v364
        %v513 = vunpack.c.h.b16 %v364
        %v514 = vunpack.c.l.b16 %v365
        %v515 = vunpack.c.h.b16 %v365
        %v516 = vunpack.c.l.b16 %v366
        %v517 = vunpack.c.h.b16 %v366
        %v518 = vunpack.c.l.b16 %v367
        %v519 = vunpack.c.h.b16 %v367
        %v520 = vunpack.c.l.b16 %v368
        %v521 = vunpack.c.h.b16 %v368
        %v522 = vunpack.c.l.b16 %v369
        %v523 = vunpack.c.h.b16 %v369
        %v524 = vunpack.c.l.b16 %v370
        %v525 = vunpack.c.h.b16 %v370
        %v526 = vunpack.c.l.b16 %v371
        %v527 = vunpack.c.h.b16 %v371
        %v528 = vunpack.c.l.b16 %v372
        %v529 = vunpack.c.h.b16 %v372
        %v530 = vunpack.c.l.b16 %v373
        %v531 = vunpack.c.h.b16 %v373
        %v532 = vunpack.c.l.b16 %v374
        %v533 = vunpack.c.h.b16 %v374
        %v534 = vunpack.c.l.b16 %v375
        %v535 = vunpack.c.h.b16 %v375
        %v536 = vunpack.c.l.b16 %v376
        %v537 = vunpack.c.h.b16 %v376
        %v538 = vunpack.c.l.b16 %v377
        %v539 = vunpack.c.h.b16 %v377
        %v540 = vunpack.c.l.b16 %v378
        %v541 = vunpack.c.h.b16 %v378
        %v542 = vunpack.c.l.b16 %v379
        %v543 = vunpack.c.h.b16 %v379
        %v544 = vunpack.c.l.b16 %v380
        %v545 = vunpack.c.h.b16 %v380
        %v546 = vunpack.c.l.b16 %v381
        %v547 = vunpack.c.h.b16 %v381
        %v548 = vunpack.c.l.b16 %v382
        %v549 = vunpack.c.h.b16 %v382
        %v550 = vunpack.c.l.b16 %v383
        %v551 = vunpack.c.h.b16 %v383
        %v552 = vunpack.c.l.b16 %v384
        %v553 = vunpack.c.h.b16 %v384
        %v554 = vunpack.c.l.b16 %v385
        %v555 = vunpack.c.h.b16 %v385
        %v556 = vunpack.c.l.b16 %v386
        %v557 = vunpack.c.h.b16 %v386
        %v558 = vunpack.c.l.b16 %v387
        %v559 = vunpack.c.h.b16 %v387
        %v560 = vunpack.c.l.b16 %v388
        %v561 = vunpack.c.h.b16 %v388
        %v562 = vunpack.c.l.b16 %v389
        %v563 = vunpack.c.h.b16 %v389
        %v564 = vunpack.c.l.b16 %v390
        %v565 = vunpack.c.h.b16 %v390
        %v566 = vunpack.c.l.b16 %v391
        %v567 = vunpack.c.h.b16 %v391
        %v568 = vunpack.c.l.b16 %v392
        %v569 = vunpack.c.h.b16 %v392
        %v570 = vunpack.c.l.b16 %v393
        %v571 = vunpack.c.h.b16 %v393
        %v572 = vunpack.c.l.b16 %v394
        %v573 = vunpack.c.h.b16 %v394
        %v574 = vunpack.c.l.b16 %v395
        %v575 = vunpack.c.h.b16 %v395
        %v576 = vunpack.c.l.b16 %v396
        %v577 = vunpack.c.h.b16 %v396
        %v578 = vunpack.c.l.b16 %v397
        %v579 = vunpack.c.h.b16 %v397
        %v580 = vunpack.c.l.b16 %v398
        %v581 = vunpack.c.h.b16 %v398
        %v582 = vunpack.c.l.b16 %v399
        %v583 = vunpack.c.h.b16 %v399
        %v584 = vunpack.c.l.b16 %v400
        %v585 = vunpack.c.h.b16 %v400
        %v586 = vunpack.c.l.b16 %v401
        %v587 = vunpack.c.h.b16 %v401
        %v588 = vunpack.c.l.b16 %v402
        %v589 = vunpack.c.h.b16 %v402
        %v590 = vunpack.c.l.b16 %v403
        %v591 = vunpack.c.h.b16 %v403
        %v592 = vunpack.c.l.b16 %v404
        %v593 = vunpack.c.h.b16 %v404
        %v594 = vunpack.c.l.b16 %v405
        %v595 = vunpack.c.h.b16 %v405
        %v596 = vunpack.c.l.b16 %v406
        %v597 = vunpack.c.h.b16 %v406
        %v598 = vunpack.c.l.b16 %v407
        %v599 = vunpack.c.h.b16 %v407
        %v600 = vpack.c.b16 %v474, %v472
        %v601 = vpack.c.b16 %v475, %v473
        %v602 = vpack.c.b16 %v478, %v476
        %v603 = vpack.c.b16 %v479, %v477
        %v604 = vpack.c.b16 %v482, %v480
        %v605 = vpack.c.b16 %v483, %v481
        %v606 = vpack.c.b16 %v486, %v484
        %v607 = vpack.c.b16 %v487, %v485
        %v608 = vpack.c.b16 %v490, %v488
        %v609 = vpack.c.b16 %v491, %v489
        %v610 = vpack.c.b16 %v494, %v492
        %v611 = vpack.c.b16 %v495, %v493
        %v612 = vpack.c.b16 %v498, %v496
        %v613 = vpack.c.b16 %v499, %v497
        %v614 = vpack.c.b16 %v502, %v500
        %v615 = vpack.c.b16 %v503, %v501
        %v616 = vpack.c.b16 %v506, %v504
        %v617 = vpack.c.b16 %v507, %v505
        %v618 = vpack.c.b16 %v510, %v508
        %v619 = vpack.c.b16 %v511, %v509
        %v620 = vpack.c.b16 %v514, %v512
        %v621 = vpack.c.b16 %v515, %v513
        %v622 = vpack.c.b16 %v518, %v516
        %v623 = vpack.c.b16 %v519, %v517
        %v624 = vpack.c.b16 %v522, %v520
        %v625 = vpack.c.b16 %v523, %v521
        %v626 = vpack.c.b16 %v526, %v524
        %v627 = vpack.c.b16 %v527, %v525
        %v628 = vpack.c.b16 %v530, %v528
        %v629 = vpack.c.b16 %v531, %v529
        %v630 = vpack.c.b16 %v534, %v532
        %v631 = vpack.c.b16 %v535, %v533
        %v632 = vpack.c.b16 %v538, %v536
        %v633 = vpack.c.b16 %v539, %v537
        %v634 = vpack.c.b16 %v542, %v540
        %v635 = vpack.c.b16 %v543, %v541
        %v636 = vpack.c.b16 %v546, %v544
        %v637 = vpack.c.b16 %v547, %v545
        %v638 = vpack.c.b16 %v550, %v548
        %v639 = vpack.c.b16 %v551, %v549
        %v640 = vpack.c.b16 %v554, %v552
        %v641 = vpack.c.b16 %v555, %v553
        %v642 = vpack.c.b16 %v558, %v556
        %v643 = vpack.c.b16 %v559, %v557
        %v644 = vpack.c.b16 %v562, %v560
        %v645 = vpack.c.b16 %v563, %v561
        %v646 = vpack.c.b16 %v566, %v564
        %v647 = vpack.c.b16 %v567, %v565
        %v648 = vpack.c.b16 %v570, %v568
        %v649 = vpack.c.b16 %v571, %v569
        %v650 = vpack.c.b16 %v574, %v572
        %v651 = vpack.c.b16 %v575, %v573
        %v652 = vpack.c.b16 %v578, %v576
        %v653 = vpack.c.b16 %v579, %v577
        %v654 = vpack.c.b16 %v582, %v580
        %v655 = vpack.c.b16 %v583, %v581
        %v656 = vpack.c.b16 %v586, %v584
        %v657 = vpack.c.b16 %v587, %v585
        %v658 = vpack.c.b16 %v590, %v588
        %v659 = vpack.c.b16 %v591, %v589
        %v660 = vpack.c.b16 %v594, %v592
        %v661 = vpack.c.b16 %v595, %v593
        %v662 = vpack.c.b16 %v598, %v596
        %v663 = vpack.c.b16 %v599, %v597
        %728 = vmatpush.bf16.msra.mxu0 %v614
        %729 = vmatpush.bf16.msra.mxu0 %v612
        %730 = vmatpush.bf16.msra.mxu0 %v610
        %731 = vmatpush.bf16.msra.mxu0 %v608
        %732 = vmatpush.bf16.msra.mxu0 %v606
        %733 = vmatpush.bf16.msra.mxu0 %v604
        %734 = vmatpush.bf16.msra.mxu0 %v602
        %735 = vmatpush.bf16.msra.mxu0 %v600
        %736 = vmatmul.bf16.gmra.mxu0 %v340
        %v737 = vpop.f32.mrf.mxu0
        %v738 = vadd.f32 0.0, %v737
        %v739 = vpop.f32.mrf.mxu0
        %740 = vdwg.mxu0
        %741 = vmatpush.bf16.msra.mxu0 %v630
        %742 = vmatpush.bf16.msra.mxu0 %v628
        %743 = vmatpush.bf16.msra.mxu0 %v626
        %744 = vmatpush.bf16.msra.mxu0 %v624
        %745 = vmatpush.bf16.msra.mxu0 %v622
        %746 = vmatpush.bf16.msra.mxu0 %v620
        %747 = vmatpush.bf16.msra.mxu0 %v618
        %748 = vmatpush.bf16.msra.mxu0 %v616
        %749 = vmatmul.bf16.gmra.mxu0 %v341
        %v750 = vpop.f32.mrf.mxu0
        %v751 = vadd.f32 %v738, %v750
        %v752 = vpop.f32.mrf.mxu0
        %753 = vdwg.mxu0
        %754 = vmatpush.bf16.msra.mxu0 %v646
        %755 = vmatpush.bf16.msra.mxu0 %v644
        %756 = vmatpush.bf16.msra.mxu0 %v642
        %757 = vmatpush.bf16.msra.mxu0 %v640
        %758 = vmatpush.bf16.msra.mxu0 %v638
        %759 = vmatpush.bf16.msra.mxu0 %v636
        %760 = vmatpush.bf16.msra.mxu0 %v634
        %761 = vmatpush.bf16.msra.mxu0 %v632
        %762 = vmatmul.bf16.gmra.mxu0 %v342
        %v763 = vpop.f32.mrf.mxu0
        %v764 = vadd.f32 %v751, %v763
        %v765 = vpop.f32.mrf.mxu0
        %766 = vdwg.mxu0
        %767 = vmatpush.bf16.msra.mxu0 %v662
        %768 = vmatpush.bf16.msra.mxu0 %v660
        %769 = vmatpush.bf16.msra.mxu0 %v658
        %770 = vmatpush.bf16.msra.mxu0 %v656
        %771 = vmatpush.bf16.msra.mxu0 %v654
        %772 = vmatpush.bf16.msra.mxu0 %v652
        %773 = vmatpush.bf16.msra.mxu0 %v650
        %774 = vmatpush.bf16.msra.mxu0 %v648
        %775 = vmatmul.bf16.gmra.mxu0 %v343
        %v776 = vpop.f32.mrf.mxu0
        %v777 = vadd.f32 %v764, %v776
        %v778 = vpop.f32.mrf.mxu0
        %779 = vdwg.mxu0
        %780 = vmatpush.bf16.msra.mxu0 %v615
        %781 = vmatpush.bf16.msra.mxu0 %v613
        %782 = vmatpush.bf16.msra.mxu0 %v611
        %783 = vmatpush.bf16.msra.mxu0 %v609
        %784 = vmatpush.bf16.msra.mxu0 %v607
        %785 = vmatpush.bf16.msra.mxu0 %v605
        %786 = vmatpush.bf16.msra.mxu0 %v603
        %787 = vmatpush.bf16.msra.mxu0 %v601
        %788 = vmatmul.bf16.gmra.mxu0 %v340
        %v789 = vpop.f32.mrf.mxu0
        %v790 = vadd.f32 0.0, %v789
        %v791 = vpop.f32.mrf.mxu0
        %792 = vdwg.mxu0
        %793 = vmatpush.bf16.msra.mxu0 %v631
        %794 = vmatpush.bf16.msra.mxu0 %v629
        %795 = vmatpush.bf16.msra.mxu0 %v627
        %796 = vmatpush.bf16.msra.mxu0 %v625
        %797 = vmatpush.bf16.msra.mxu0 %v623
        %798 = vmatpush.bf16.msra.mxu0 %v621
        %799 = vmatpush.bf16.msra.mxu0 %v619
        %800 = vmatpush.bf16.msra.mxu0 %v617
        %801 = vmatmul.bf16.gmra.mxu0 %v341
        %v802 = vpop.f32.mrf.mxu0
        %v803 = vadd.f32 %v790, %v802
        %v804 = vpop.f32.mrf.mxu0
        %805 = vdwg.mxu0
        %806 = vmatpush.bf16.msra.mxu0 %v647
        %807 = vmatpush.bf16.msra.mxu0 %v645
        %808 = vmatpush.bf16.msra.mxu0 %v643
        %809 = vmatpush.bf16.msra.mxu0 %v641
        %810 = vmatpush.bf16.msra.mxu0 %v639
        %811 = vmatpush.bf16.msra.mxu0 %v637
        %812 = vmatpush.bf16.msra.mxu0 %v635
        %813 = vmatpush.bf16.msra.mxu0 %v633
        %814 = vmatmul.bf16.gmra.mxu0 %v342
        %v815 = vpop.f32.mrf.mxu0
        %v816 = vadd.f32 %v803, %v815
        %v817 = vpop.f32.mrf.mxu0
        %818 = vdwg.mxu0
        %819 = vmatpush.bf16.msra.mxu0 %v663
        %820 = vmatpush.bf16.msra.mxu0 %v661
        %821 = vmatpush.bf16.msra.mxu0 %v659
        %822 = vmatpush.bf16.msra.mxu0 %v657
        %823 = vmatpush.bf16.msra.mxu0 %v655
        %824 = vmatpush.bf16.msra.mxu0 %v653
        %825 = vmatpush.bf16.msra.mxu0 %v651
        %826 = vmatpush.bf16.msra.mxu0 %v649
        %827 = vmatmul.bf16.gmra.mxu0 %v343
        %v828 = vpop.f32.mrf.mxu0
        %v829 = vadd.f32 %v816, %v828
        %v830 = vpop.f32.mrf.mxu0
        %831 = vdwg.mxu0
        %v832 = vadd.f32 %v334, %v777
        %v833 = vadd.f32 %v335, %v829
        %834 = vst [vmem:[#allocation2] sm:$0xff] %v832
        %835 = vst [vmem:[#allocation2 + $0x8] sm:$0xff] %v833
        %p836 = scmp.eq.s32.totalorder %s29, 1
        // Predicated region
        $region61: #{tpu_custom_call.1} parent=39 // pred_check
          %p837 = pneg %p836
        $region62: #{tpu_custom_call.1} parent=39 // pred_check_branch
          %839 = sbr.rel (%p837) target = $region64
        $region63: #{tpu_custom_call.1} parent=39 // pred_region
          %v840 = vld [vmem:[#allocation2] sm:$0xff]
          %v841 = vld [vmem:[#allocation2 + $0x8] sm:$0xff]
          %v842 = vld [vmem:[#allocation8] sm:$0x3]
          %v844 = vperm.slane %v842, 0
          %v845 = vperm.slane %v842, 1
          %v848 = vadd.f32 %v840, %v844
          %v849 = vadd.f32 %v841, %v845
          %v850 = vmax.f32 %v848, 0.0
          %v851 = vmax.f32 %v849, 0.0
          %v852 = vpack.c.bf16 %v850, %v850
          %v853 = vpack.c.bf16 %v851, %v851
          %v854 = vld [vmem:[#allocation9] sm:$0xf]
          %v855 = vld [vmem:[#allocation9 + $0x4] sm:$0xf]
          %v856 = vld [vmem:[#allocation9 + $0x8] sm:$0xf]
          %v857 = vld [vmem:[#allocation9 + $0xc] sm:$0xf]
          %v858 = vld [vmem:[#allocation9 + $0x10] sm:$0xf]
          %v859 = vld [vmem:[#allocation9 + $0x14] sm:$0xf]
          %v860 = vld [vmem:[#allocation9 + $0x18] sm:$0xf]
          %v861 = vld [vmem:[#allocation9 + $0x1c] sm:$0xf]
          %v862 = vld [vmem:[#allocation9 + $0x20] sm:$0xf]
          %v863 = vld [vmem:[#allocation9 + $0x24] sm:$0xf]
          %v864 = vld [vmem:[#allocation9 + $0x28] sm:$0xf]
          %v865 = vld [vmem:[#allocation9 + $0x2c] sm:$0xf]
          %v866 = vld [vmem:[#allocation9 + $0x30] sm:$0xf]
          %v867 = vld [vmem:[#allocation9 + $0x34] sm:$0xf]
          %v868 = vld [vmem:[#allocation9 + $0x38] sm:$0xf]
          %v869 = vld [vmem:[#allocation9 + $0x3c] sm:$0xf]
          %v870 = vld [vmem:[#allocation9 + $0x40] sm:$0xf]
          %v871 = vld [vmem:[#allocation9 + $0x44] sm:$0xf]
          %v872 = vld [vmem:[#allocation9 + $0x48] sm:$0xf]
          %v873 = vld [vmem:[#allocation9 + $0x4c] sm:$0xf]
          %v874 = vld [vmem:[#allocation9 + $0x50] sm:$0xf]
          %v875 = vld [vmem:[#allocation9 + $0x54] sm:$0xf]
          %v876 = vld [vmem:[#allocation9 + $0x58] sm:$0xf]
          %v877 = vld [vmem:[#allocation9 + $0x5c] sm:$0xf]
          %v878 = vld [vmem:[#allocation9 + $0x60] sm:$0xf]
          %v879 = vld [vmem:[#allocation9 + $0x64] sm:$0xf]
          %v880 = vld [vmem:[#allocation9 + $0x68] sm:$0xf]
          %v881 = vld [vmem:[#allocation9 + $0x6c] sm:$0xf]
          %v882 = vld [vmem:[#allocation9 + $0x70] sm:$0xf]
          %v883 = vld [vmem:[#allocation9 + $0x74] sm:$0xf]
          %v884 = vld [vmem:[#allocation9 + $0x78] sm:$0xf]
          %v885 = vld [vmem:[#allocation9 + $0x7c] sm:$0xf]
          %v886 = vld [vmem:[%s4] sm:$0x1]
          %v888 = vperm.slane %v886, 0
          %v922 = vunpack.c.l.b16 %v854
          %v923 = vunpack.c.l.b16 %v855
          %v924 = vunpack.c.l.b16 %v856
          %v925 = vunpack.c.l.b16 %v857
          %v926 = vunpack.c.l.b16 %v858
          %v927 = vunpack.c.l.b16 %v859
          %v928 = vunpack.c.l.b16 %v860
          %v929 = vunpack.c.l.b16 %v861
          %v930 = vunpack.c.l.b16 %v862
          %v931 = vunpack.c.l.b16 %v863
          %v932 = vunpack.c.l.b16 %v864
          %v933 = vunpack.c.l.b16 %v865
          %v934 = vunpack.c.l.b16 %v866
          %v935 = vunpack.c.l.b16 %v867
          %v936 = vunpack.c.l.b16 %v868
          %v937 = vunpack.c.l.b16 %v869
          %v938 = vunpack.c.l.b16 %v870
          %v939 = vunpack.c.l.b16 %v871
          %v940 = vunpack.c.l.b16 %v872
          %v941 = vunpack.c.l.b16 %v873
          %v942 = vunpack.c.l.b16 %v874
          %v943 = vunpack.c.l.b16 %v875
          %v944 = vunpack.c.l.b16 %v876
          %v945 = vunpack.c.l.b16 %v877
          %v946 = vunpack.c.l.b16 %v878
          %v947 = vunpack.c.l.b16 %v879
          %v948 = vunpack.c.l.b16 %v880
          %v949 = vunpack.c.l.b16 %v881
          %v950 = vunpack.c.l.b16 %v882
          %v951 = vunpack.c.l.b16 %v883
          %v952 = vunpack.c.l.b16 %v884
          %v953 = vunpack.c.l.b16 %v885
          %v954 = vpack.c.b16 %v923, %v922
          %v955 = vpack.c.b16 %v925, %v924
          %v956 = vpack.c.b16 %v927, %v926
          %v957 = vpack.c.b16 %v929, %v928
          %v958 = vpack.c.b16 %v931, %v930
          %v959 = vpack.c.b16 %v933, %v932
          %v960 = vpack.c.b16 %v935, %v934
          %v961 = vpack.c.b16 %v937, %v936
          %v962 = vpack.c.b16 %v939, %v938
          %v963 = vpack.c.b16 %v941, %v940
          %v964 = vpack.c.b16 %v943, %v942
          %v965 = vpack.c.b16 %v945, %v944
          %v966 = vpack.c.b16 %v947, %v946
          %v967 = vpack.c.b16 %v949, %v948
          %v968 = vpack.c.b16 %v951, %v950
          %v969 = vpack.c.b16 %v953, %v952
          %986 = vmatpush.bf16.msra.mxu0 %v961
          %987 = vmatpush.bf16.msra.mxu0 %v960
          %988 = vmatpush.bf16.msra.mxu0 %v959
          %989 = vmatpush.bf16.msra.mxu0 %v958
          %990 = vmatpush.bf16.msra.mxu0 %v957
          %991 = vmatpush.bf16.msra.mxu0 %v956
          %992 = vmatpush.bf16.msra.mxu0 %v955
          %993 = vmatpush.bf16.msra.mxu0 %v954
          %994 = vmatmul.bf16.gmra.mxu0 %v852
          %v995 = vpop.f32.mrf.mxu0
          %v996 = vadd.f32 %v888, %v995
          %v997 = vpop.f32.mrf.mxu0
          %998 = vdwg.mxu0
          %999 = vmatpush.bf16.msra.mxu0 %v969
          %1000 = vmatpush.bf16.msra.mxu0 %v968
          %1001 = vmatpush.bf16.msra.mxu0 %v967
          %1002 = vmatpush.bf16.msra.mxu0 %v966
          %1003 = vmatpush.bf16.msra.mxu0 %v965
          %1004 = vmatpush.bf16.msra.mxu0 %v964
          %1005 = vmatpush.bf16.msra.mxu0 %v963
          %1006 = vmatpush.bf16.msra.mxu0 %v962
          %1007 = vmatmul.bf16.gmra.mxu0 %v853
          %v1008 = vpop.f32.mrf.mxu0
          %v1009 = vadd.f32 %v996, %v1008
          %v1010 = vpop.f32.mrf.mxu0
          %1011 = vdwg.mxu0
          %v1012 = vlaneseq
          %v1013 = vand.u32 %v1012, 127
          %vm1014 = vcmp.ge.s32.totalorder %v1013, 48
          %vm1015 = vcmp.lt.s32.totalorder %v1013, 51
          %vm1016 = vmand %vm1014, %vm1015
          %v1017 = vsel %vm1016, %v1009, -1e+30
          %1018 = vmax.xlane.f32.xlu0 %v1017
          %v1019 = vpop.xlane.xlu0 %1018
          %v1020 = vsub.f32 %v1017, %v1019
          %v1021 = vmul.f32 %v1020, 1.442695
          %v1022 = vpow.pop %v1021
          %1023 = vadd.xlane.f32.xlu0 %v1022
          %v1024 = vpop.xlane.xlu0 %1023
          %v1025 = vrcp.pop %v1024
          %v1026 = vmul.f32 %v1024, %v1025
          %v1027 = vsub.f32 1.0, %v1026
          %v1028 = vmul.f32 %v1025, %v1027
          %v1029 = vadd.f32 %v1025, %v1028
          %vm1030 = vweird.f32 %v1024
          %vm1031 = vweird.f32 %v1025
          %vm1032 = vmor %vm1030, %vm1031
          %v1033 = vsel %vm1032, %v1025, %v1029
          %v1034 = vand.u32 2147483647, %v1024
          %vm1035 = vcmp.eq.f32.partialorder %v1034, 8.507059e+37
          %v1036 = vand.u32 %v1024, 2147483648
          %v1037 = vor.u32 1.1754944e-38, %v1036
          %v1038 = vsel %vm1035, %v1037, %v1033
          %v1039 = vmul.f32 %v1022, %v1038
          %v1040 = vsel %vm1016, %v1039, %v1009
          %1041 = vst [vmem:[#allocation11] sm:$0xff] %v1040
        $region64: #{tpu_custom_call.1} parent=39 // pred_fallthru
          _
        // Predicated region
        $region65: #{tpu_custom_call.1} parent=39 // pred_check
          %p1042 = pneg %p171
        $region66: #{tpu_custom_call.1} parent=39 // pred_check_branch
          %1044 = sbr.rel (%p1042) target = $region68
        $region67: #{tpu_custom_call.1} parent=39 // pred_region
          %1046 = vsyncadd [#allocation5], 0
          %s1047 = smul.addr %s28, 8
          %s1048 = scalar_lea.hbm %s5, %s1047
          %s1050 = sshll.u32 [#allocation11], 4
          %s1051 = int_to_ptr.vmem [resolvable:$true] %s1050
          %s1052 = sshll.u32 %s1048, 4
          %s1053 = int_to_ptr.hbm [resolvable:$true] %s1052
          %1055 = dma.vmem_to_hbm [thread:$0]  %s1051, 128, %s1053, [#allocation5]
        $region68: #{tpu_custom_call.1} parent=39 // pred_fallthru
          _
        // Predicated region
        $region69: #{tpu_custom_call.1} parent=39 // pred_check
          %p1056 = pneg %p171
        $region70: #{tpu_custom_call.1} parent=39 // pred_check_branch
          %1058 = sbr.rel (%p1056) target = $region72
        $region71: #{tpu_custom_call.1} parent=39 // pred_region
          %1060 = dma.done [#allocation5], 128
        $region72: #{tpu_custom_call.1} parent=39 // pred_fallthru
          _
      $region40: #{tpu_custom_call.1} parent=5 // pred_fallthru
        _
      %p1061 = scmp.le.s32.totalorder 2, %s19
      // Predicated region
      $region73: #{tpu_custom_call.1} parent=5 // pred_check
        %p1062 = pneg %p1061
      $region74: #{tpu_custom_call.1} parent=5 // pred_check_branch
        %1064 = sbr.rel (%p1062) target = $region76
      $region75: #{tpu_custom_call.1} parent=5 // pred_region
        %s1065 = ssub.s32 %s19, 2
      $region76: #{tpu_custom_call.1} parent=5 // pred_fallthru
        _
    $region6: #{tpu_custom_call.1} parent=1 // loop_footer
      %s23 = sadd.s32 1, %s19
    $region7: #{tpu_custom_call.1} parent=1 // loop_footer_branch
      %18 = sbr.rel target = $region3
    $region8: #{tpu_custom_call.1} parent=1 // loop_exit
      _
    %1066 = vsyncpa [#allocation4], 1
    %s1067 = scalar_lea.sflag [#allocation4], 1
    %1068 = vsyncpa %s1067, 1
    %1069 = vsyncpa [#allocation7], 1
    %s1070 = scalar_lea.sflag [#allocation7], 1
    %1071 = vsyncpa %s1070, 1
    %1072 = vsyncpa [#allocation10], 1
    %1073 = vsyncpa [#allocation5], 1
    %s1074 = scalar_lea.sflag [#allocation5], 1
    %1075 = vsyncpa %s1074, 1

// kernel: tpu_custom_call.1
$region0: #{tpu_custom_call.1}
  #allocation0 [shape = 'u32[]', space=smem, size = 0x4, offset = 0x4, fixed_abs, tag = 'smem constant byte address 0x4 - core index']
  #allocation1 [shape = 'u32[72,128]{1,0:T(1,128)}', space=vmem, size = 0x9000, scoped, tag = 'internal scratch']
  #allocation2 [shape = 'f32[8,256]{1,0:T(8,128)}', space=vmem, size = 0x2000, scoped, tag = 'scratch operand']
  %s0 = inlined_call_operand.hbm [shape: f32[8,1024], index: 0, kind: input, shape index: {}]
  %s1 = inlined_call_operand.hbm [shape: bf16[1024,256], index: 1, kind: input, shape index: {}]
  %s2 = inlined_call_operand.hbm [shape: f32[1,256], index: 2, kind: input, shape index: {}]
  %s3 = inlined_call_operand.hbm [shape: bf16[256,128], index: 3, kind: input, shape index: {}]
  %s4 = inlined_call_operand.vmem [shape: f32[1,128], index: 4, kind: input, shape index: {}]
  %s5 = inlined_call_operand.hbm [shape: f32[8,128], index: 5, kind: output, shape index: {}]
  %s6 = sld [smem:[#allocation0]]
  $region77: #{tpu_custom_call.1} parent=0
    _
  %s8 = ssub.s32 1, %s6
  %s9 = scalar_select 0, %s8, %s6
  $region1: #{tpu_custom_call.1} parent=0
    #allocation3 [shape = 'u8[32768]{0}', space=vmem, size = 0x8000, scoped, tag = 'input window, operand 0']
    #allocation4 [shape = 's32[2]{0}', space=sflag, size = 0x8, scoped, tag = 'scoped memory for tpu_custom_call.1']
    #allocation5 [shape = 's32[2]{0}', space=sflag, size = 0x8, scoped, tag = 'scoped memory for tpu_custom_call.1']
    #allocation6 [shape = 'u8[524288]{0}', space=vmem, size = 0x80000, scoped, tag = 'input window, operand 1']
    #allocation7 [shape = 's32[2]{0}', space=sflag, size = 0x8, scoped, tag = 'scoped memory for tpu_custom_call.1']
    #allocation8 [shape = 'u8[1024]{0}', space=vmem, size = 0x400, scoped, tag = 'input window, operand 2, single buffered']
    #allocation9 [shape = 'u8[65536]{0}', space=vmem, size = 0x10000, scoped, tag = 'input window, operand 3, single buffered']
    #allocation10 [shape = 's32[1]{0}', space=sflag, size = 0x4, scoped, tag = 'scoped memory for tpu_custom_call.1']
    #allocation11 [shape = 'u8[4096]{0}', space=vmem, size = 0x1000, scoped, tag = 'output window, operand 0, single buffered']
    %10 = vsyncpa [#allocation4], 0
    %s11 = scalar_lea.sflag [#allocation4], 1
    %12 = vsyncpa %s11, 0
    %13 = vsyncpa [#allocation7], 0
    %s14 = scalar_lea.sflag [#allocation7], 1
    %15 = vsyncpa %s14, 0
    %16 = vsyncpa [#allocation10], 0
    %17 = vsyncpa [#allocation5], 0
    loop: start=0, step=1, limit=4
    $region2: #{tpu_custom_call.1} parent=1 // loop_pre_header
      _
    $region3: #{tpu_custom_call.1} parent=1 // loop_header
      %s19 = sphi 0, %s23
      %p20 = scmp.ge.s32.totalorder %s19, 4
      %s26 = sphi 0, %s38
      %s27 = sphi 0, %s34
      %s28 = sphi 0, %s26
      %s29 = sphi 0, %s27
      %s30 = sphi 0, %s28
      %s31 = sphi 0, %s29
      %s43 = sphi 0, %s45
      %s46 = sphi 0, %s43
      %s47 = sphi 0, %s46
      %s63 = sphi 0, %s47
      %s69 = sphi 0, %s71
      %s72 = sphi 0, %s69
      %s73 = sphi 0, %s72
      %s89 = sphi 0, %s73
      %s93 = sphi 0, %s93
      %s95 = sphi 0, %s93
      %s96 = sphi 0, %s95
      %s110 = sphi 0, %s96
      %s114 = sphi 0, %s114
      %s116 = sphi 0, %s114
      %s117 = sphi 0, %s116
      %s131 = sphi 0, %s117
      %s135 = sphi 0, %s135
      %s137 = sphi 0, %s135
      %s138 = sphi 0, %s137
      %s152 = sphi 0, %s138
      %s158 = sphi 0, %s160
      %s161 = sphi 0, %s158
      %s162 = sphi 0, %s161
      %s178 = sphi 0, %s162
    $region4: #{tpu_custom_call.1} parent=1 // loop_header_branch
      %22 = sbr.rel (%p20) target = $region8
    $region5: #{tpu_custom_call.1} parent=1 // loop_body
      %s24 = ssub.s32 %s19, 1
      %s25 = ssub.s32 %s19, 2
      %s32 = sadd.s32 1, %s27
      %p33 = scmp.ge.s32.totalorder %s32, 2
      %s34 = scalar_select %p33, 0, %s32
      %s35 = sadd.s32 1, %s26
      %s36 = scalar_select %p33, %s35, %s26
      %p37 = scmp.ge.s32.totalorder %s36, 1
      %s38 = scalar_select %p37, 0, %s36
      %s39 = ssub.s32 %s26, %s38
      %s40 = ssub.s32 %s27, %s34
      %s41 = sor.u32 %s39, %s40
      %p42 = scmp.eq.s32.totalorder %s41, 0
      %s44 = sadd.s32 %s43, 1
      %s45 = scalar_select %p42, %s43, %s44
      %p48 = pneg %p42
      %p49 = scmp.eq.s32.totalorder %s19, 1
      %p50 = por %p48, %p49
      %p51 = scmp.ne.s32.totalorder %s43, %s46
      %p52 = scmp.eq.s32.totalorder %s19, 0
      %p53 = por %p51, %p52
      %p54 = scmp.ne.s32.totalorder %s43, %s46
      %p55 = scmp.eq.s32.totalorder %s24, 1
      %p56 = por %p54, %p55
      %p57 = scmp.ne.s32.totalorder %s46, %s47
      %p58 = scmp.eq.s32.totalorder %s24, 0
      %p59 = por %p57, %p58
      %p60 = scmp.ne.s32.totalorder %s46, %s47
      %p61 = scmp.eq.s32.totalorder %s25, 1
      %p62 = por %p60, %p61
      %p64 = scmp.ne.s32.totalorder %s47, %s63
      %p65 = scmp.eq.s32.totalorder %s25, 0
      %p66 = por %p64, %p65
      %s67 = ssub.s32 %s27, %s34
      %p68 = scmp.eq.s32.totalorder %s67, 0
      %s70 = sadd.s32 %s69, 1
      %s71 = scalar_select %p68, %s69, %s70
      %p74 = pneg %p68
      %p75 = scmp.eq.s32.totalorder %s19, 1
      %p76 = por %p74, %p75
      %p77 = scmp.ne.s32.totalorder %s69, %s72
      %p78 = scmp.eq.s32.totalorder %s19, 0
      %p79 = por %p77, %p78
      %p80 = scmp.ne.s32.totalorder %s69, %s72
      %p81 = scmp.eq.s32.totalorder %s24, 1
      %p82 = por %p80, %p81
      %p83 = scmp.ne.s32.totalorder %s72, %s73
      %p84 = scmp.eq.s32.totalorder %s24, 0
      %p85 = por %p83, %p84
      %p86 = scmp.ne.s32.totalorder %s72, %s73
      %p87 = scmp.eq.s32.totalorder %s25, 1
      %p88 = por %p86, %p87
      %p90 = scmp.ne.s32.totalorder %s73, %s89
      %p91 = scmp.eq.s32.totalorder %s25, 0
      %p92 = por %p90, %p91
      %s94 = sadd.s32 %s93, 1
      %p97 = scmp.eq.s32.totalorder %s19, 1
      %p98 = scmp.ne.s32.totalorder %s93, %s95
      %p99 = scmp.eq.s32.totalorder %s19, 0
      %p100 = por %p98, %p99
      %p101 = scmp.ne.s32.totalorder %s93, %s95
      %p102 = scmp.eq.s32.totalorder %s24, 1
      %p103 = por %p101, %p102
      %p104 = scmp.ne.s32.totalorder %s95, %s96
      %p105 = scmp.eq.s32.totalorder %s24, 0
      %p106 = por %p104, %p105
      %p107 = scmp.ne.s32.totalorder %s95, %s96
      %p108 = scmp.eq.s32.totalorder %s25, 1
      %p109 = por %p107, %p108
      %p111 = scmp.ne.s32.totalorder %s96, %s110
      %p112 = scmp.eq.s32.totalorder %s25, 0
      %p113 = por %p111, %p112
      %s115 = sadd.s32 %s114, 1
      %p118 = scmp.eq.s32.totalorder %s19, 1
      %p119 = scmp.ne.s32.totalorder %s114, %s116
      %p120 = scmp.eq.s32.totalorder %s19, 0
      %p121 = por %p119, %p120
      %p122 = scmp.ne.s32.totalorder %s114, %s116
      %p123 = scmp.eq.s32.totalorder %s24, 1
      %p124 = por %p122, %p123
      %p125 = scmp.ne.s32.totalorder %s116, %s117
      %p126 = scmp.eq.s32.totalorder %s24, 0
      %p127 = por %p125, %p126
      %p128 = scmp.ne.s32.totalorder %s116, %s117
      %p129 = scmp.eq.s32.totalorder %s25, 1
      %p130 = por %p128, %p129
      %p132 = scmp.ne.s32.totalorder %s117, %s131
      %p133 = scmp.eq.s32.totalorder %s25, 0
      %p134 = por %p132, %p133
      %s136 = sadd.s32 %s135, 1
      %p139 = scmp.eq.s32.totalorder %s19, 1
      %p140 = scmp.ne.s32.totalorder %s135, %s137
      %p141 = scmp.eq.s32.totalorder %s19, 0
      %p142 = por %p140, %p141
      %p143 = scmp.ne.s32.totalorder %s135, %s137
      %p144 = scmp.eq.s32.totalorder %s24, 1
      %p145 = por %p143, %p144
      %p146 = scmp.ne.s32.totalorder %s137, %s138
      %p147 = scmp.eq.s32.totalorder %s24, 0
      %p148 = por %p146, %p147
      %p149 = scmp.ne.s32.totalorder %s137, %s138
      %p150 = scmp.eq.s32.totalorder %s25, 1
      %p151 = por %p149, %p150
      %p153 = scmp.ne.s32.totalorder %s138, %s152
      %p154 = scmp.eq.s32.totalorder %s25, 0
      %p155 = por %p153, %p154
      %s156 = ssub.s32 %s26, %s38
      %p157 = scmp.eq.s32.totalorder %s156, 0
      %s159 = sadd.s32 %s158, 1
      %s160 = scalar_select %p157, %s158, %s159
      %p163 = pneg %p157
      %p164 = scmp.eq.s32.totalorder %s19, 1
      %p165 = por %p163, %p164
      %p166 = scmp.ne.s32.totalorder %s158, %s161
      %p167 = scmp.eq.s32.totalorder %s19, 0
      %p168 = por %p166, %p167
      %p169 = scmp.ne.s32.totalorder %s158, %s161
      %p170 = scmp.eq.s32.totalorder %s24, 1
      %p171 = por %p169, %p170
      %p172 = scmp.ne.s32.totalorder %s161, %s162
      %p173 = scmp.eq.s32.totalorder %s24, 0
      %p174 = por %p172, %p173
      %p175 = scmp.ne.s32.totalorder %s161, %s162
      %p176 = scmp.eq.s32.totalorder %s25, 1
      %p177 = por %p175, %p176
      %p179 = scmp.ne.s32.totalorder %s162, %s178
      %p180 = scmp.eq.s32.totalorder %s25, 0
      %p181 = por %p179, %p180
      %p182 = scmp.le.s32.totalorder 1, %s19
      %p183 = scmp.lt.s32.totalorder %s19, 3
      %p184 = pnand %p182, %p183
      %p185 = pneg %p184
      // Predicated region
      $region9: #{tpu_custom_call.1} parent=5 // pred_check
        _
      $region10: #{tpu_custom_call.1} parent=5 // pred_check_branch
        %187 = sbr.rel (%p184) target = $region12
      $region11: #{tpu_custom_call.1} parent=5 // pred_region
        %s188 = ssub.s32 %s19, 1
        // Predicated region
        $region13: #{tpu_custom_call.1} parent=11 // pred_check
          %p189 = pneg %p106
        $region14: #{tpu_custom_call.1} parent=11 // pred_check_branch
          %191 = sbr.rel (%p189) target = $region16
        $region15: #{tpu_custom_call.1} parent=11 // pred_region
          %193 = vsyncadd [#allocation7], 0
          %s195 = sshll.u32 %s2, 4
          %s196 = int_to_ptr.hbm [resolvable:$true] %s195
          %s197 = sshll.u32 [#allocation8], 4
          %s198 = int_to_ptr.vmem [resolvable:$true] %s197
          %200 = dma.hbm_to_vmem [thread:$0]  %s196, 32, %s198, [#allocation7]
        $region16: #{tpu_custom_call.1} parent=11 // pred_fallthru
          _
        // Predicated region
        $region17: #{tpu_custom_call.1} parent=11 // pred_check
          %p201 = pneg %p127
        $region18: #{tpu_custom_call.1} parent=11 // pred_check_branch
          %203 = sbr.rel (%p201) target = $region20
        $region19: #{tpu_custom_call.1} parent=11 // pred_region
          %205 = vsyncadd [#allocation10], 0
          %s206 = sshll.u32 %s3, 4
          %s207 = int_to_ptr.hbm [resolvable:$true] %s206
          %s208 = sshll.u32 [#allocation9], 4
          %s209 = int_to_ptr.vmem [resolvable:$true] %s208
          %214 = dma.hbm_to_vmem [thread:$0]  %s207, 2048, %s209, [#allocation10], 64, 64, 4
        $region20: #{tpu_custom_call.1} parent=11 // pred_fallthru
          _
        // Predicated region
        $region21: #{tpu_custom_call.1} parent=11 // pred_check
          %p215 = pneg %p148
        $region22: #{tpu_custom_call.1} parent=11 // pred_check_branch
          %217 = sbr.rel (%p215) target = $region24
        $region23: #{tpu_custom_call.1} parent=11 // pred_region
          _
        $region24: #{tpu_custom_call.1} parent=11 // pred_fallthru
          _
      $region12: #{tpu_custom_call.1} parent=5 // pred_fallthru
        _
      %p218 = scmp.lt.s32.totalorder %s19, 2
      // Predicated region
      $region25: #{tpu_custom_call.1} parent=5 // pred_check
        %p219 = pneg %p218
      $region26: #{tpu_custom_call.1} parent=5 // pred_check_branch
        %221 = sbr.rel (%p219) target = $region28
      $region27: #{tpu_custom_call.1} parent=5 // pred_region
        // Predicated region
        $region29: #{tpu_custom_call.1} parent=27 // pred_check
          %p222 = pneg %p53
        $region30: #{tpu_custom_call.1} parent=27 // pred_check_branch
          %224 = sbr.rel (%p222) target = $region32
        $region31: #{tpu_custom_call.1} parent=27 // pred_region
          %s225 = sand.u32 %s43, 1
          %s226 = scalar_lea.sflag [#allocation4], %s225
          %s227 = sand.u32 %s43, 1
          %s228 = smul.addr %s227, 32
          %s229 = scalar_lea.vmem [#allocation3], %s228
          %s230 = smul.u32 4, %s27
          %232 = vsyncadd %s226, 0
          %s233 = smul.addr %s26, 8
          %s234 = sadd.s32 %s230, %s233
          %s235 = smul.addr %s234, 8
          %s236 = scalar_lea.hbm %s0, %s235
          %s238 = sshll.u32 %s236, 4
          %s239 = int_to_ptr.hbm [resolvable:$true] %s238
          %s240 = sshll.u32 %s229, 4
          %s241 = int_to_ptr.vmem [resolvable:$true] %s240
          %243 = dma.hbm_to_vmem [thread:$0]  %s239, 512, %s241, %s226
        $region32: #{tpu_custom_call.1} parent=27 // pred_fallthru
          _
        // Predicated region
        $region33: #{tpu_custom_call.1} parent=27 // pred_check
          %p244 = pneg %p79
        $region34: #{tpu_custom_call.1} parent=27 // pred_check_branch
          %246 = sbr.rel (%p244) target = $region36
        $region35: #{tpu_custom_call.1} parent=27 // pred_region
          %s247 = sand.u32 %s19, 1
          %s248 = scalar_lea.sflag [#allocation7], %s247
          %s249 = sand.u32 %s69, 1
          %s250 = smul.addr %s249, 512
          %s251 = scalar_lea.vmem [#allocation6], %s250
          %s252 = smul.u32 64, %s27
          %254 = vsyncadd %s248, 0
          %s255 = smul.addr %s252, 2
          %s256 = smul.addr %s255, 4
          %s257 = scalar_lea.hbm %s1, %s256
          %s258 = sshll.u32 %s257, 4
          %s259 = int_to_ptr.hbm [resolvable:$true] %s258
          %s260 = sshll.u32 %s251, 4
          %s261 = int_to_ptr.vmem [resolvable:$true] %s260
          %266 = dma.hbm_to_vmem [thread:$0]  %s259, 8192, %s261, %s248, 128, 128, 8
        $region36: #{tpu_custom_call.1} parent=27 // pred_fallthru
          _
      $region28: #{tpu_custom_call.1} parent=5 // pred_fallthru
        _
      %p267 = scmp.le.s32.totalorder 1, %s19
      %p268 = scmp.lt.s32.totalorder %s19, 3
      %p269 = pnand %p267, %p268
      %p270 = pneg %p269
      // Predicated region
      $region37: #{tpu_custom_call.1} parent=5 // pred_check
        _
      $region38: #{tpu_custom_call.1} parent=5 // pred_check_branch
        %272 = sbr.rel (%p269) target = $region40
      $region39: #{tpu_custom_call.1} parent=5 // pred_region
        %s273 = ssub.s32 %s19, 1
        %s274 = sand.u32 %s46, 1
        %s275 = scalar_lea.sflag [#allocation4], %s274
        %s276 = sand.u32 %s46, 1
        %s277 = smul.addr %s276, 32
        %s278 = scalar_lea.vmem [#allocation3], %s277
        // Predicated region
        $region41: #{tpu_custom_call.1} parent=39 // pred_check
          %p279 = pneg %p59
        $region42: #{tpu_custom_call.1} parent=39 // pred_check_branch
          %281 = sbr.rel (%p279) target = $region44
        $region43: #{tpu_custom_call.1} parent=39 // pred_region
          %283 = dma.done %s275, 512
        $region44: #{tpu_custom_call.1} parent=39 // pred_fallthru
          _
        %s284 = sand.u32 %s24, 1
        %s285 = scalar_lea.sflag [#allocation7], %s284
        %s286 = sand.u32 %s72, 1
        %s287 = smul.addr %s286, 512
        %s288 = scalar_lea.vmem [#allocation6], %s287
        // Predicated region
        $region45: #{tpu_custom_call.1} parent=39 // pred_check
          %p289 = pneg %p85
        $region46: #{tpu_custom_call.1} parent=39 // pred_check_branch
          %291 = sbr.rel (%p289) target = $region48
        $region47: #{tpu_custom_call.1} parent=39 // pred_region
          %293 = dma.done %s285, 8192
        $region48: #{tpu_custom_call.1} parent=39 // pred_fallthru
          _
        // Predicated region
        $region49: #{tpu_custom_call.1} parent=39 // pred_check
          %p294 = pneg %p106
        $region50: #{tpu_custom_call.1} parent=39 // pred_check_branch
          %296 = sbr.rel (%p294) target = $region52
        $region51: #{tpu_custom_call.1} parent=39 // pred_region
          %298 = dma.done [#allocation7], 32
        $region52: #{tpu_custom_call.1} parent=39 // pred_fallthru
          _
        // Predicated region
        $region53: #{tpu_custom_call.1} parent=39 // pred_check
          %p299 = pneg %p127
        $region54: #{tpu_custom_call.1} parent=39 // pred_check_branch
          %301 = sbr.rel (%p299) target = $region56
        $region55: #{tpu_custom_call.1} parent=39 // pred_region
          %303 = dma.done [#allocation10], 2048
        $region56: #{tpu_custom_call.1} parent=39 // pred_fallthru
          _
        %s304 = sand.u32 %s46, 1
        %s305 = scalar_lea.sflag [#allocation4], %s304
        %s306 = sand.u32 %s46, 1
        %s307 = smul.addr %s306, 32
        %s308 = scalar_lea.vmem [#allocation3], %s307
        %p309 = pneg %p59
        %p310 = pneg %p56
        %s311 = sand.u32 %s24, 1
        %s312 = scalar_lea.sflag [#allocation7], %s311
        %s313 = sand.u32 %s72, 1
        %s314 = smul.addr %s313, 512
        %s315 = scalar_lea.vmem [#allocation6], %s314
        %p316 = pneg %p85
        %p317 = pneg %p82
        %p318 = pneg %p106
        %p319 = pneg %p103
        %p320 = pneg %p127
        %p321 = pneg %p124
        %p322 = pneg %p148
        %p323 = pneg %p145
        %p324 = pneg %p174
        %p325 = pneg %p171
        %s326 = smul.u32 4, %s29
        %s327 = smul.u32 64, %s29
        %p328 = scmp.eq.s32.totalorder %s29, 0
        // Predicated region
        $region57: #{tpu_custom_call.1} parent=39 // pred_check
          %p329 = pneg %p328
        $region58: #{tpu_custom_call.1} parent=39 // pred_check_branch
          %331 = sbr.rel (%p329) target = $region60
        $region59: #{tpu_custom_call.1} parent=39 // pred_region
          %332 = vst [vmem:[#allocation2] sm:$0xff] 0.0
          %333 = vst [vmem:[#allocation2 + $0x8] sm:$0xff] 0.0
        $region60: #{tpu_custom_call.1} parent=39 // pred_fallthru
          _
        %v334 = vld [vmem:[#allocation2] sm:$0xff]
        %v335 = vld [vmem:[#allocation2 + $0x8] sm:$0xff]
        %v336 = vld [vmem:[%s278] sm:$0xff]
        %v337 = vld [vmem:[%s278 + $0x8] sm:$0xff]
        %v338 = vld [vmem:[%s278 + $0x10] sm:$0xff]
        %v339 = vld [vmem:[%s278 + $0x18] sm:$0xff]
        %v340 = vpack.c.bf16 %v336, %v336
        %v341 = vpack.c.bf16 %v337, %v337
        %v342 = vpack.c.bf16 %v338, %v338
        %v343 = vpack.c.bf16 %v339, %v339
        %v344 = vld [vmem:[%s288] sm:$0xff]
        %v345 = vld [vmem:[%s288 + $0x8] sm:$0xff]
        %v346 = vld [vmem:[%s288 + $0x10] sm:$0xff]
        %v347 = vld [vmem:[%s288 + $0x18] sm:$0xff]
        %v348 = vld [vmem:[%s288 + $0x20] sm:$0xff]
        %v349 = vld [vmem:[%s288 + $0x28] sm:$0xff]
        %v350 = vld [vmem:[%s288 + $0x30] sm:$0xff]
        %v351 = vld [vmem:[%s288 + $0x38] sm:$0xff]
        %v352 = vld [vmem:[%s288 + $0x40] sm:$0xff]
        %v353 = vld [vmem:[%s288 + $0x48] sm:$0xff]
        %v354 = vld [vmem:[%s288 + $0x50] sm:$0xff]
        %v355 = vld [vmem:[%s288 + $0x58] sm:$0xff]
        %v356 = vld [vmem:[%s288 + $0x60] sm:$0xff]
        %v357 = vld [vmem:[%s288 + $0x68] sm:$0xff]
        %v358 = vld [vmem:[%s288 + $0x70] sm:$0xff]
        %v359 = vld [vmem:[%s288 + $0x78] sm:$0xff]
        %v360 = vld [vmem:[%s288 + $0x80] sm:$0xff]
        %v361 = vld [vmem:[%s288 + $0x88] sm:$0xff]
        %v362 = vld [vmem:[%s288 + $0x90] sm:$0xff]
        %v363 = vld [vmem:[%s288 + $0x98] sm:$0xff]
        %v364 = vld [vmem:[%s288 + $0xa0] sm:$0xff]
        %v365 = vld [vmem:[%s288 + $0xa8] sm:$0xff]
        %v366 = vld [vmem:[%s288 + $0xb0] sm:$0xff]
        %v367 = vld [vmem:[%s288 + $0xb8] sm:$0xff]
        %v368 = vld [vmem:[%s288 + $0xc0] sm:$0xff]
        %v369 = vld [vmem:[%s288 + $0xc8] sm:$0xff]
        %v370 = vld [vmem:[%s288 + $0xd0] sm:$0xff]
        %v371 = vld [vmem:[%s288 + $0xd8] sm:$0xff]
        %v372 = vld [vmem:[%s288 + $0xe0] sm:$0xff]
        %v373 = vld [vmem:[%s288 + $0xe8] sm:$0xff]
        %v374 = vld [vmem:[%s288 + $0xf0] sm:$0xff]
        %v375 = vld [vmem:[%s288 + $0xf8] sm:$0xff]
        %v376 = vld [vmem:[%s288 + $0x100] sm:$0xff]
        %v377 = vld [vmem:[%s288 + $0x108] sm:$0xff]
        %v378 = vld [vmem:[%s288 + $0x110] sm:$0xff]
        %v379 = vld [vmem:[%s288 + $0x118] sm:$0xff]
        %v380 = vld [vmem:[%s288 + $0x120] sm:$0xff]
        %v381 = vld [vmem:[%s288 + $0x128] sm:$0xff]
        %v382 = vld [vmem:[%s288 + $0x130] sm:$0xff]
        %v383 = vld [vmem:[%s288 + $0x138] sm:$0xff]
        %v384 = vld [vmem:[%s288 + $0x140] sm:$0xff]
        %v385 = vld [vmem:[%s288 + $0x148] sm:$0xff]
        %v386 = vld [vmem:[%s288 + $0x150] sm:$0xff]
        %v387 = vld [vmem:[%s288 + $0x158] sm:$0xff]
        %v388 = vld [vmem:[%s288 + $0x160] sm:$0xff]
        %v389 = vld [vmem:[%s288 + $0x168] sm:$0xff]
        %v390 = vld [vmem:[%s288 + $0x170] sm:$0xff]
        %v391 = vld [vmem:[%s288 + $0x178] sm:$0xff]
        %v392 = vld [vmem:[%s288 + $0x180] sm:$0xff]
        %v393 = vld [vmem:[%s288 + $0x188] sm:$0xff]
        %v394 = vld [vmem:[%s288 + $0x190] sm:$0xff]
        %v395 = vld [vmem:[%s288 + $0x198] sm:$0xff]
        %v396 = vld [vmem:[%s288 + $0x1a0] sm:$0xff]
        %v397 = vld [vmem:[%s288 + $0x1a8] sm:$0xff]
        %v398 = vld [vmem:[%s288 + $0x1b0] sm:$0xff]
        %v399 = vld [vmem:[%s288 + $0x1b8] sm:$0xff]
        %v400 = vld [vmem:[%s288 + $0x1c0] sm:$0xff]
        %v401 = vld [vmem:[%s288 + $0x1c8] sm:$0xff]
        %v402 = vld [vmem:[%s288 + $0x1d0] sm:$0xff]
        %v403 = vld [vmem:[%s288 + $0x1d8] sm:$0xff]
        %v404 = vld [vmem:[%s288 + $0x1e0] sm:$0xff]
        %v405 = vld [vmem:[%s288 + $0x1e8] sm:$0xff]
        %v406 = vld [vmem:[%s288 + $0x1f0] sm:$0xff]
        %v407 = vld [vmem:[%s288 + $0x1f8] sm:$0xff]
        %v472 = vunpack.c.l.b16 %v344
        %v473 = vunpack.c.h.b16 %v344
        %v474 = vunpack.c.l.b16 %v345
        %v475 = vunpack.c.h.b16 %v345
        %v476 = vunpack.c.l.b16 %v346
        %v477 = vunpack.c.h.b16 %v346
        %v478 = vunpack.c.l.b16 %v347
        %v479 = vunpack.c.h.b16 %v347
        %v480 = vunpack.c.l.b16 %v348
        %v481 = vunpack.c.h.b16 %v348
        %v482 = vunpack.c.l.b16 %v349
        %v483 = vunpack.c.h.b16 %v349
        %v484 = vunpack.c.l.b16 %v350
        %v485 = vunpack.c.h.b16 %v350
        %v486 = vunpack.c.l.b16 %v351
        %v487 = vunpack.c.h.b16 %v351
        %v488 = vunpack.c.l.b16 %v352
        %v489 = vunpack.c.h.b16 %v352
        %v490 = vunpack.c.l.b16 %v353
        %v491 = vunpack.c.h.b16 %v353
        %v492 = vunpack.c.l.b16 %v354
        %v493 = vunpack.c.h.b16 %v354
        %v494 = vunpack.c.l.b16 %v355
        %v495 = vunpack.c.h.b16 %v355
        %v496 = vunpack.c.l.b16 %v356
        %v497 = vunpack.c.h.b16 %v356
        %v498 = vunpack.c.l.b16 %v357
        %v499 = vunpack.c.h.b16 %v357
        %v500 = vunpack.c.l.b16 %v358
        %v501 = vunpack.c.h.b16 %v358
        %v502 = vunpack.c.l.b16 %v359
        %v503 = vunpack.c.h.b16 %v359
        %v504 = vunpack.c.l.b16 %v360
        %v505 = vunpack.c.h.b16 %v360
        %v506 = vunpack.c.l.b16 %v361
        %v507 = vunpack.c.h.b16 %v361
        %v508 = vunpack.c.l.b16 %v362
        %v509 = vunpack.c.h.b16 %v362
        %v510 = vunpack.c.l.b16 %v363
        %v511 = vunpack.c.h.b16 %v363
        %v512 = vunpack.c.l.b16 %v364
        %v513 = vunpack.c.h.b16 %v364
        %v514 = vunpack.c.l.b16 %v365
        %v515 = vunpack.c.h.b16 %v365
        %v516 = vunpack.c.l.b16 %v366
        %v517 = vunpack.c.h.b16 %v366
        %v518 = vunpack.c.l.b16 %v367
        %v519 = vunpack.c.h.b16 %v367
        %v520 = vunpack.c.l.b16 %v368
        %v521 = vunpack.c.h.b16 %v368
        %v522 = vunpack.c.l.b16 %v369
        %v523 = vunpack.c.h.b16 %v369
        %v524 = vunpack.c.l.b16 %v370
        %v525 = vunpack.c.h.b16 %v370
        %v526 = vunpack.c.l.b16 %v371
        %v527 = vunpack.c.h.b16 %v371
        %v528 = vunpack.c.l.b16 %v372
        %v529 = vunpack.c.h.b16 %v372
        %v530 = vunpack.c.l.b16 %v373
        %v531 = vunpack.c.h.b16 %v373
        %v532 = vunpack.c.l.b16 %v374
        %v533 = vunpack.c.h.b16 %v374
        %v534 = vunpack.c.l.b16 %v375
        %v535 = vunpack.c.h.b16 %v375
        %v536 = vunpack.c.l.b16 %v376
        %v537 = vunpack.c.h.b16 %v376
        %v538 = vunpack.c.l.b16 %v377
        %v539 = vunpack.c.h.b16 %v377
        %v540 = vunpack.c.l.b16 %v378
        %v541 = vunpack.c.h.b16 %v378
        %v542 = vunpack.c.l.b16 %v379
        %v543 = vunpack.c.h.b16 %v379
        %v544 = vunpack.c.l.b16 %v380
        %v545 = vunpack.c.h.b16 %v380
        %v546 = vunpack.c.l.b16 %v381
        %v547 = vunpack.c.h.b16 %v381
        %v548 = vunpack.c.l.b16 %v382
        %v549 = vunpack.c.h.b16 %v382
        %v550 = vunpack.c.l.b16 %v383
        %v551 = vunpack.c.h.b16 %v383
        %v552 = vunpack.c.l.b16 %v384
        %v553 = vunpack.c.h.b16 %v384
        %v554 = vunpack.c.l.b16 %v385
        %v555 = vunpack.c.h.b16 %v385
        %v556 = vunpack.c.l.b16 %v386
        %v557 = vunpack.c.h.b16 %v386
        %v558 = vunpack.c.l.b16 %v387
        %v559 = vunpack.c.h.b16 %v387
        %v560 = vunpack.c.l.b16 %v388
        %v561 = vunpack.c.h.b16 %v388
        %v562 = vunpack.c.l.b16 %v389
        %v563 = vunpack.c.h.b16 %v389
        %v564 = vunpack.c.l.b16 %v390
        %v565 = vunpack.c.h.b16 %v390
        %v566 = vunpack.c.l.b16 %v391
        %v567 = vunpack.c.h.b16 %v391
        %v568 = vunpack.c.l.b16 %v392
        %v569 = vunpack.c.h.b16 %v392
        %v570 = vunpack.c.l.b16 %v393
        %v571 = vunpack.c.h.b16 %v393
        %v572 = vunpack.c.l.b16 %v394
        %v573 = vunpack.c.h.b16 %v394
        %v574 = vunpack.c.l.b16 %v395
        %v575 = vunpack.c.h.b16 %v395
        %v576 = vunpack.c.l.b16 %v396
        %v577 = vunpack.c.h.b16 %v396
        %v578 = vunpack.c.l.b16 %v397
        %v579 = vunpack.c.h.b16 %v397
        %v580 = vunpack.c.l.b16 %v398
        %v581 = vunpack.c.h.b16 %v398
        %v582 = vunpack.c.l.b16 %v399
        %v583 = vunpack.c.h.b16 %v399
        %v584 = vunpack.c.l.b16 %v400
        %v585 = vunpack.c.h.b16 %v400
        %v586 = vunpack.c.l.b16 %v401
        %v587 = vunpack.c.h.b16 %v401
        %v588 = vunpack.c.l.b16 %v402
        %v589 = vunpack.c.h.b16 %v402
        %v590 = vunpack.c.l.b16 %v403
        %v591 = vunpack.c.h.b16 %v403
        %v592 = vunpack.c.l.b16 %v404
        %v593 = vunpack.c.h.b16 %v404
        %v594 = vunpack.c.l.b16 %v405
        %v595 = vunpack.c.h.b16 %v405
        %v596 = vunpack.c.l.b16 %v406
        %v597 = vunpack.c.h.b16 %v406
        %v598 = vunpack.c.l.b16 %v407
        %v599 = vunpack.c.h.b16 %v407
        %v600 = vpack.c.b16 %v474, %v472
        %v601 = vpack.c.b16 %v475, %v473
        %v602 = vpack.c.b16 %v478, %v476
        %v603 = vpack.c.b16 %v479, %v477
        %v604 = vpack.c.b16 %v482, %v480
        %v605 = vpack.c.b16 %v483, %v481
        %v606 = vpack.c.b16 %v486, %v484
        %v607 = vpack.c.b16 %v487, %v485
        %v608 = vpack.c.b16 %v490, %v488
        %v609 = vpack.c.b16 %v491, %v489
        %v610 = vpack.c.b16 %v494, %v492
        %v611 = vpack.c.b16 %v495, %v493
        %v612 = vpack.c.b16 %v498, %v496
        %v613 = vpack.c.b16 %v499, %v497
        %v614 = vpack.c.b16 %v502, %v500
        %v615 = vpack.c.b16 %v503, %v501
        %v616 = vpack.c.b16 %v506, %v504
        %v617 = vpack.c.b16 %v507, %v505
        %v618 = vpack.c.b16 %v510, %v508
        %v619 = vpack.c.b16 %v511, %v509
        %v620 = vpack.c.b16 %v514, %v512
        %v621 = vpack.c.b16 %v515, %v513
        %v622 = vpack.c.b16 %v518, %v516
        %v623 = vpack.c.b16 %v519, %v517
        %v624 = vpack.c.b16 %v522, %v520
        %v625 = vpack.c.b16 %v523, %v521
        %v626 = vpack.c.b16 %v526, %v524
        %v627 = vpack.c.b16 %v527, %v525
        %v628 = vpack.c.b16 %v530, %v528
        %v629 = vpack.c.b16 %v531, %v529
        %v630 = vpack.c.b16 %v534, %v532
        %v631 = vpack.c.b16 %v535, %v533
        %v632 = vpack.c.b16 %v538, %v536
        %v633 = vpack.c.b16 %v539, %v537
        %v634 = vpack.c.b16 %v542, %v540
        %v635 = vpack.c.b16 %v543, %v541
        %v636 = vpack.c.b16 %v546, %v544
        %v637 = vpack.c.b16 %v547, %v545
        %v638 = vpack.c.b16 %v550, %v548
        %v639 = vpack.c.b16 %v551, %v549
        %v640 = vpack.c.b16 %v554, %v552
        %v641 = vpack.c.b16 %v555, %v553
        %v642 = vpack.c.b16 %v558, %v556
        %v643 = vpack.c.b16 %v559, %v557
        %v644 = vpack.c.b16 %v562, %v560
        %v645 = vpack.c.b16 %v563, %v561
        %v646 = vpack.c.b16 %v566, %v564
        %v647 = vpack.c.b16 %v567, %v565
        %v648 = vpack.c.b16 %v570, %v568
        %v649 = vpack.c.b16 %v571, %v569
        %v650 = vpack.c.b16 %v574, %v572
        %v651 = vpack.c.b16 %v575, %v573
        %v652 = vpack.c.b16 %v578, %v576
        %v653 = vpack.c.b16 %v579, %v577
        %v654 = vpack.c.b16 %v582, %v580
        %v655 = vpack.c.b16 %v583, %v581
        %v656 = vpack.c.b16 %v586, %v584
        %v657 = vpack.c.b16 %v587, %v585
        %v658 = vpack.c.b16 %v590, %v588
        %v659 = vpack.c.b16 %v591, %v589
        %v660 = vpack.c.b16 %v594, %v592
        %v661 = vpack.c.b16 %v595, %v593
        %v662 = vpack.c.b16 %v598, %v596
        %v663 = vpack.c.b16 %v599, %v597
        %728 = vmatpush.bf16.msra.mxu0 %v614
        %729 = vmatpush.bf16.msra.mxu0 %v612
        %730 = vmatpush.bf16.msra.mxu0 %v610
        %731 = vmatpush.bf16.msra.mxu0 %v608
        %732 = vmatpush.bf16.msra.mxu0 %v606
        %733 = vmatpush.bf16.msra.mxu0 %v604
        %734 = vmatpush.bf16.msra.mxu0 %v602
        %735 = vmatpush.bf16.msra.mxu0 %v600
        %736 = vmatmul.bf16.gmra.mxu0 %v340
        %v737 = vpop.f32.mrf.mxu0
        %v738 = vadd.f32 0.0, %v737
        %v739 = vpop.f32.mrf.mxu0
        %740 = vdwg.mxu0
        %741 = vmatpush.bf16.msra.mxu0 %v630
        %742 = vmatpush.bf16.msra.mxu0 %v628
        %743 = vmatpush.bf16.msra.mxu0 %v626
        %744 = vmatpush.bf16.msra.mxu0 %v624
        %745 = vmatpush.bf16.msra.mxu0 %v622
        %746 = vmatpush.bf16.msra.mxu0 %v620
        %747 = vmatpush.bf16.msra.mxu0 %v618
        %748 = vmatpush.bf16.msra.mxu0 %v616
        %749 = vmatmul.bf16.gmra.mxu0 %v341
        %v750 = vpop.f32.mrf.mxu0
        %v751 = vadd.f32 %v738, %v750
        %v752 = vpop.f32.mrf.mxu0
        %753 = vdwg.mxu0
        %754 = vmatpush.bf16.msra.mxu0 %v646
        %755 = vmatpush.bf16.msra.mxu0 %v644
        %756 = vmatpush.bf16.msra.mxu0 %v642
        %757 = vmatpush.bf16.msra.mxu0 %v640
        %758 = vmatpush.bf16.msra.mxu0 %v638
        %759 = vmatpush.bf16.msra.mxu0 %v636
        %760 = vmatpush.bf16.msra.mxu0 %v634
        %761 = vmatpush.bf16.msra.mxu0 %v632
        %762 = vmatmul.bf16.gmra.mxu0 %v342
        %v763 = vpop.f32.mrf.mxu0
        %v764 = vadd.f32 %v751, %v763
        %v765 = vpop.f32.mrf.mxu0
        %766 = vdwg.mxu0
        %767 = vmatpush.bf16.msra.mxu0 %v662
        %768 = vmatpush.bf16.msra.mxu0 %v660
        %769 = vmatpush.bf16.msra.mxu0 %v658
        %770 = vmatpush.bf16.msra.mxu0 %v656
        %771 = vmatpush.bf16.msra.mxu0 %v654
        %772 = vmatpush.bf16.msra.mxu0 %v652
        %773 = vmatpush.bf16.msra.mxu0 %v650
        %774 = vmatpush.bf16.msra.mxu0 %v648
        %775 = vmatmul.bf16.gmra.mxu0 %v343
        %v776 = vpop.f32.mrf.mxu0
        %v777 = vadd.f32 %v764, %v776
        %v778 = vpop.f32.mrf.mxu0
        %779 = vdwg.mxu0
        %780 = vmatpush.bf16.msra.mxu0 %v615
        %781 = vmatpush.bf16.msra.mxu0 %v613
        %782 = vmatpush.bf16.msra.mxu0 %v611
        %783 = vmatpush.bf16.msra.mxu0 %v609
        %784 = vmatpush.bf16.msra.mxu0 %v607
        %785 = vmatpush.bf16.msra.mxu0 %v605
        %786 = vmatpush.bf16.msra.mxu0 %v603
        %787 = vmatpush.bf16.msra.mxu0 %v601
        %788 = vmatmul.bf16.gmra.mxu0 %v340
        %v789 = vpop.f32.mrf.mxu0
        %v790 = vadd.f32 0.0, %v789
        %v791 = vpop.f32.mrf.mxu0
        %792 = vdwg.mxu0
        %793 = vmatpush.bf16.msra.mxu0 %v631
        %794 = vmatpush.bf16.msra.mxu0 %v629
        %795 = vmatpush.bf16.msra.mxu0 %v627
        %796 = vmatpush.bf16.msra.mxu0 %v625
        %797 = vmatpush.bf16.msra.mxu0 %v623
        %798 = vmatpush.bf16.msra.mxu0 %v621
        %799 = vmatpush.bf16.msra.mxu0 %v619
        %800 = vmatpush.bf16.msra.mxu0 %v617
        %801 = vmatmul.bf16.gmra.mxu0 %v341
        %v802 = vpop.f32.mrf.mxu0
        %v803 = vadd.f32 %v790, %v802
        %v804 = vpop.f32.mrf.mxu0
        %805 = vdwg.mxu0
        %806 = vmatpush.bf16.msra.mxu0 %v647
        %807 = vmatpush.bf16.msra.mxu0 %v645
        %808 = vmatpush.bf16.msra.mxu0 %v643
        %809 = vmatpush.bf16.msra.mxu0 %v641
        %810 = vmatpush.bf16.msra.mxu0 %v639
        %811 = vmatpush.bf16.msra.mxu0 %v637
        %812 = vmatpush.bf16.msra.mxu0 %v635
        %813 = vmatpush.bf16.msra.mxu0 %v633
        %814 = vmatmul.bf16.gmra.mxu0 %v342
        %v815 = vpop.f32.mrf.mxu0
        %v816 = vadd.f32 %v803, %v815
        %v817 = vpop.f32.mrf.mxu0
        %818 = vdwg.mxu0
        %819 = vmatpush.bf16.msra.mxu0 %v663
        %820 = vmatpush.bf16.msra.mxu0 %v661
        %821 = vmatpush.bf16.msra.mxu0 %v659
        %822 = vmatpush.bf16.msra.mxu0 %v657
        %823 = vmatpush.bf16.msra.mxu0 %v655
        %824 = vmatpush.bf16.msra.mxu0 %v653
        %825 = vmatpush.bf16.msra.mxu0 %v651
        %826 = vmatpush.bf16.msra.mxu0 %v649
        %827 = vmatmul.bf16.gmra.mxu0 %v343
        %v828 = vpop.f32.mrf.mxu0
        %v829 = vadd.f32 %v816, %v828
        %v830 = vpop.f32.mrf.mxu0
        %831 = vdwg.mxu0
        %v832 = vadd.f32 %v334, %v777
        %v833 = vadd.f32 %v335, %v829
        %834 = vst [vmem:[#allocation2] sm:$0xff] %v832
        %835 = vst [vmem:[#allocation2 + $0x8] sm:$0xff] %v833
        %p836 = scmp.eq.s32.totalorder %s29, 1
        // Predicated region
        $region61: #{tpu_custom_call.1} parent=39 // pred_check
          %p837 = pneg %p836
        $region62: #{tpu_custom_call.1} parent=39 // pred_check_branch
          %839 = sbr.rel (%p837) target = $region64
        $region63: #{tpu_custom_call.1} parent=39 // pred_region
          %v840 = vld [vmem:[#allocation2] sm:$0xff]
          %v841 = vld [vmem:[#allocation2 + $0x8] sm:$0xff]
          %v842 = vld [vmem:[#allocation8] sm:$0x3]
          %v844 = vperm.slane %v842, 0
          %v845 = vperm.slane %v842, 1
          %v848 = vadd.f32 %v840, %v844
          %v849 = vadd.f32 %v841, %v845
          %v850 = vmax.f32 %v848, 0.0
          %v851 = vmax.f32 %v849, 0.0
          %v852 = vpack.c.bf16 %v850, %v850
          %v853 = vpack.c.bf16 %v851, %v851
          %v854 = vld [vmem:[#allocation9] sm:$0xf]
          %v855 = vld [vmem:[#allocation9 + $0x4] sm:$0xf]
          %v856 = vld [vmem:[#allocation9 + $0x8] sm:$0xf]
          %v857 = vld [vmem:[#allocation9 + $0xc] sm:$0xf]
          %v858 = vld [vmem:[#allocation9 + $0x10] sm:$0xf]
          %v859 = vld [vmem:[#allocation9 + $0x14] sm:$0xf]
          %v860 = vld [vmem:[#allocation9 + $0x18] sm:$0xf]
          %v861 = vld [vmem:[#allocation9 + $0x1c] sm:$0xf]
          %v862 = vld [vmem:[#allocation9 + $0x20] sm:$0xf]
          %v863 = vld [vmem:[#allocation9 + $0x24] sm:$0xf]
          %v864 = vld [vmem:[#allocation9 + $0x28] sm:$0xf]
          %v865 = vld [vmem:[#allocation9 + $0x2c] sm:$0xf]
          %v866 = vld [vmem:[#allocation9 + $0x30] sm:$0xf]
          %v867 = vld [vmem:[#allocation9 + $0x34] sm:$0xf]
          %v868 = vld [vmem:[#allocation9 + $0x38] sm:$0xf]
          %v869 = vld [vmem:[#allocation9 + $0x3c] sm:$0xf]
          %v870 = vld [vmem:[#allocation9 + $0x40] sm:$0xf]
          %v871 = vld [vmem:[#allocation9 + $0x44] sm:$0xf]
          %v872 = vld [vmem:[#allocation9 + $0x48] sm:$0xf]
          %v873 = vld [vmem:[#allocation9 + $0x4c] sm:$0xf]
          %v874 = vld [vmem:[#allocation9 + $0x50] sm:$0xf]
          %v875 = vld [vmem:[#allocation9 + $0x54] sm:$0xf]
          %v876 = vld [vmem:[#allocation9 + $0x58] sm:$0xf]
          %v877 = vld [vmem:[#allocation9 + $0x5c] sm:$0xf]
          %v878 = vld [vmem:[#allocation9 + $0x60] sm:$0xf]
          %v879 = vld [vmem:[#allocation9 + $0x64] sm:$0xf]
          %v880 = vld [vmem:[#allocation9 + $0x68] sm:$0xf]
          %v881 = vld [vmem:[#allocation9 + $0x6c] sm:$0xf]
          %v882 = vld [vmem:[#allocation9 + $0x70] sm:$0xf]
          %v883 = vld [vmem:[#allocation9 + $0x74] sm:$0xf]
          %v884 = vld [vmem:[#allocation9 + $0x78] sm:$0xf]
          %v885 = vld [vmem:[#allocation9 + $0x7c] sm:$0xf]
          %v886 = vld [vmem:[%s4] sm:$0x1]
          %v888 = vperm.slane %v886, 0
          %v922 = vunpack.c.l.b16 %v854
          %v923 = vunpack.c.l.b16 %v855
          %v924 = vunpack.c.l.b16 %v856
          %v925 = vunpack.c.l.b16 %v857
          %v926 = vunpack.c.l.b16 %v858
          %v927 = vunpack.c.l.b16 %v859
          %v928 = vunpack.c.l.b16 %v860
          %v929 = vunpack.c.l.b16 %v861
          %v930 = vunpack.c.l.b16 %v862
          %v931 = vunpack.c.l.b16 %v863
          %v932 = vunpack.c.l.b16 %v864
          %v933 = vunpack.c.l.b16 %v865
          %v934 = vunpack.c.l.b16 %v866
          %v935 = vunpack.c.l.b16 %v867
          %v936 = vunpack.c.l.b16 %v868
          %v937 = vunpack.c.l.b16 %v869
          %v938 = vunpack.c.l.b16 %v870
          %v939 = vunpack.c.l.b16 %v871
          %v940 = vunpack.c.l.b16 %v872
          %v941 = vunpack.c.l.b16 %v873
          %v942 = vunpack.c.l.b16 %v874
          %v943 = vunpack.c.l.b16 %v875
          %v944 = vunpack.c.l.b16 %v876
          %v945 = vunpack.c.l.b16 %v877
          %v946 = vunpack.c.l.b16 %v878
          %v947 = vunpack.c.l.b16 %v879
          %v948 = vunpack.c.l.b16 %v880
          %v949 = vunpack.c.l.b16 %v881
          %v950 = vunpack.c.l.b16 %v882
          %v951 = vunpack.c.l.b16 %v883
          %v952 = vunpack.c.l.b16 %v884
          %v953 = vunpack.c.l.b16 %v885
          %v954 = vpack.c.b16 %v923, %v922
          %v955 = vpack.c.b16 %v925, %v924
          %v956 = vpack.c.b16 %v927, %v926
          %v957 = vpack.c.b16 %v929, %v928
          %v958 = vpack.c.b16 %v931, %v930
          %v959 = vpack.c.b16 %v933, %v932
          %v960 = vpack.c.b16 %v935, %v934
          %v961 = vpack.c.b16 %v937, %v936
          %v962 = vpack.c.b16 %v939, %v938
          %v963 = vpack.c.b16 %v941, %v940
          %v964 = vpack.c.b16 %v943, %v942
          %v965 = vpack.c.b16 %v945, %v944
          %v966 = vpack.c.b16 %v947, %v946
          %v967 = vpack.c.b16 %v949, %v948
          %v968 = vpack.c.b16 %v951, %v950
          %v969 = vpack.c.b16 %v953, %v952
          %986 = vmatpush.bf16.msra.mxu0 %v961
          %987 = vmatpush.bf16.msra.mxu0 %v960
          %988 = vmatpush.bf16.msra.mxu0 %v959
          %989 = vmatpush.bf16.msra.mxu0 %v958
          %990 = vmatpush.bf16.msra.mxu0 %v957
          %991 = vmatpush.bf16.msra.mxu0 %v956
          %992 = vmatpush.bf16.msra.mxu0 %v955
          %993 = vmatpush.bf16.msra.mxu0 %v954
          %994 = vmatmul.bf16.gmra.mxu0 %v852
          %v995 = vpop.f32.mrf.mxu0
          %v996 = vadd.f32 %v888, %v995
          %v997 = vpop.f32.mrf.mxu0
          %998 = vdwg.mxu0
          %999 = vmatpush.bf16.msra.mxu0 %v969
          %1000 = vmatpush.bf16.msra.mxu0 %v968
          %1001 = vmatpush.bf16.msra.mxu0 %v967
          %1002 = vmatpush.bf16.msra.mxu0 %v966
          %1003 = vmatpush.bf16.msra.mxu0 %v965
          %1004 = vmatpush.bf16.msra.mxu0 %v964
          %1005 = vmatpush.bf16.msra.mxu0 %v963
          %1006 = vmatpush.bf16.msra.mxu0 %v962
          %1007 = vmatmul.bf16.gmra.mxu0 %v853
          %v1008 = vpop.f32.mrf.mxu0
          %v1009 = vadd.f32 %v996, %v1008
          %v1010 = vpop.f32.mrf.mxu0
          %1011 = vdwg.mxu0
          %v1012 = vlaneseq
          %v1013 = vand.u32 %v1012, 127
          %vm1014 = vcmp.ge.s32.totalorder %v1013, 48
          %vm1015 = vcmp.lt.s32.totalorder %v1013, 51
          %vm1016 = vmand %vm1014, %vm1015
          %v1017 = vsel %vm1016, %v1009, -1e+30
          %1018 = vmax.xlane.f32.xlu0 %v1017
          %v1019 = vpop.xlane.xlu0 %1018
          %v1020 = vsub.f32 %v1017, %v1019
          %v1021 = vmul.f32 %v1020, 1.442695
          %v1022 = vpow.pop %v1021
          %1023 = vadd.xlane.f32.xlu0 %v1022
          %v1024 = vpop.xlane.xlu0 %1023
          %v1025 = vrcp.pop %v1024
          %v1026 = vmul.f32 %v1024, %v1025
          %v1027 = vsub.f32 1.0, %v1026
          %v1028 = vmul.f32 %v1025, %v1027
          %v1029 = vadd.f32 %v1025, %v1028
          %vm1030 = vweird.f32 %v1024
          %vm1031 = vweird.f32 %v1025
          %vm1032 = vmor %vm1030, %vm1031
          %v1033 = vsel %vm1032, %v1025, %v1029
          %v1034 = vand.u32 2147483647, %v1024
          %vm1035 = vcmp.eq.f32.partialorder %v1034, 8.507059e+37
          %v1036 = vand.u32 %v1024, 2147483648
          %v1037 = vor.u32 1.1754944e-38, %v1036
          %v1038 = vsel %vm1035, %v1037, %v1033
          %v1039 = vmul.f32 %v1022, %v1038
          %v1040 = vsel %vm1016, %v1039, %v1009
          %1041 = vst [vmem:[#allocation11] sm:$0xff] %v1040
        $region64: #{tpu_custom_call.1} parent=39 // pred_fallthru
          _
        // Predicated region
        $region65: #{tpu_custom_call.1} parent=39 // pred_check
          %p1042 = pneg %p171
        $region66: #{tpu_custom_call.1} parent=39 // pred_check_branch
          %1044 = sbr.rel (%p1042) target = $region68
        $region67: #{tpu_custom_call.1} parent=39 // pred_region
          %1046 = vsyncadd [#allocation5], 0
          %s1047 = smul.addr %s28, 8
          %s1048 = scalar_lea.hbm %s5, %s1047
          %s1050 = sshll.u32 [#allocation11], 4
          %s1051 = int_to_ptr.vmem [resolvable:$true] %s1050
          %s1052 = sshll.u32 %s1048, 4
          %s1053 = int_to_ptr.hbm [resolvable:$true] %s1052
          %1055 = dma.vmem_to_hbm [thread:$0]  %s1051, 128, %s1053, [#allocation5]
        $region68: #{tpu_custom_call.1} parent=39 // pred_fallthru
          _
        // Predicated region
        $region69: #{tpu_custom_call.1} parent=39 // pred_check
          %p1056 = pneg %p171
        $region70: #{tpu_custom_call.1} parent=39 // pred_check_branch
          %1058 = sbr.rel (%p1056) target = $region72
        $region71: #{tpu_custom_call.1} parent=39 // pred_region
          %1060 = dma.done [#allocation5], 128
        $region72: #{tpu_custom_call.1} parent=39 // pred_fallthru
          _
      $region40: #{tpu_custom_call.1} parent=5 // pred_fallthru
        _
      %p1061 = scmp.le.s32.totalorder 2, %s19
      // Predicated region
      $region73: #{tpu_custom_call.1} parent=5 // pred_check
        %p1062 = pneg %p1061
      $region74: #{tpu_custom_call.1} parent=5 // pred_check_branch
        %1064 = sbr.rel (%p1062) target = $region76
      $region75: #{tpu_custom_call.1} parent=5 // pred_region
        %s1065 = ssub.s32 %s19, 2
      $region76: #{tpu_custom_call.1} parent=5 // pred_fallthru
        _
    $region6: #{tpu_custom_call.1} parent=1 // loop_footer
      %s23 = sadd.s32 1, %s19
    $region7: #{tpu_custom_call.1} parent=1 // loop_footer_branch
      %18 = sbr.rel target = $region3
    $region8: #{tpu_custom_call.1} parent=1 // loop_exit
      _
    %1066 = vsyncpa [#allocation4], 1
    %s1067 = scalar_lea.sflag [#allocation4], 1
    %1068 = vsyncpa %s1067, 1
    %1069 = vsyncpa [#allocation7], 1
    %s1070 = scalar_lea.sflag [#allocation7], 1
    %1071 = vsyncpa %s1070, 1
    %1072 = vsyncpa [#allocation10], 1
    %1073 = vsyncpa [#allocation5], 1
    %s1074 = scalar_lea.sflag [#allocation5], 1
    %1075 = vsyncpa %s1074, 1

</llo_original>
